<compile_context>
chip_gen: v5e
topology: v5e:2x2
jax: 0.10.0
libtpu: 0.0.40
codegen_flags: <defaults>
</compile_context>

<pallas_src>
import functools

import jax
import jax.numpy as jnp
from jax.experimental import pallas as pl
from jax.experimental.pallas import tpu as pltpu

H1, H2, H3 = 256, 128, 64
H3_PAD = 128          # pad the 64-wide hidden layer to a full 128-lane vreg
LANES = 128


def mi_net_kernel(x_ref, w1_ref, b1_ref, w2_ref, b2_ref, w3_ref, b3_ref,
                  wf_ref, bf_ref, o_ref, *, bags_per_block, n_inst):
    # ---- instance-level MLP: 3 MXU matmuls (bf16 operands, f32 accumulate) ----
    # x arrives f32; cast to bf16 in-kernel (hidden under MXU/DMA slack).
    x = x_ref[...].astype(jnp.bfloat16)
    h = jnp.dot(x, w1_ref[...], preferred_element_type=jnp.float32)
    h = jnp.maximum(h + b1_ref[...], 0.0)                      # (rows, 256) f32

    h = jnp.dot(h.astype(jnp.bfloat16), w2_ref[...],
                preferred_element_type=jnp.float32)
    h = jnp.maximum(h + b2_ref[...], 0.0)                      # (rows, 128) f32

    h = jnp.dot(h.astype(jnp.bfloat16), w3_ref[...],
                preferred_element_type=jnp.float32)
    h = jnp.maximum(h + b3_ref[...], 0.0)                      # (rows, 128) padded
    # nn.Dropout() -> identity (eval mode)

    # ---- MIL max pooling over the instances of each bag (sublane reduction) ----
    # n_inst is a multiple of 8, so the reshape stays (8,128)-tile aligned.
    h = h.reshape(bags_per_block, n_inst, H3_PAD)
    pooled = jnp.max(h, axis=1)                                # (bags, 128)

    # ---- bag-level classifier: VPU multiply + lane reduce (no 1-wide MXU op) ----
    logit = jnp.sum(pooled * wf_ref[...], axis=-1, keepdims=True) + bf_ref[0, 0]
    y = jax.nn.sigmoid(logit)                                  # (bags, 1) f32

    # lane-dense output slab; wrapper slices column 0.
    o_ref[...] = jnp.broadcast_to(y, (bags_per_block, LANES))


def prepare_params(params):
    """One-time weight preprocessing: bf16 casts + 128-lane zero padding.

    Call once and cache; the padded columns are inert (ReLU(0)=0, zero classifier
    weights), so results are unchanged."""
    w1, b1, w2, b2, w3, b3, wf, bf = params
    w1b = w1.astype(jnp.bfloat16)
    w2b = w2.astype(jnp.bfloat16)
    w3p = (jnp.zeros((H2, H3_PAD), jnp.float32).at[:, :H3].set(w3)
           .astype(jnp.bfloat16))
    b3p = jnp.zeros((1, H3_PAD), jnp.float32).at[:, :H3].set(b3)
    wfp = jnp.zeros((1, H3_PAD), jnp.float32).at[:, :H3].set(wf.reshape(1, H3))
    return (w1b, b1, w2b, b2, w3p, b3p, wfp, bf)


def _select_tiling(n_bags, n_inst_pad, max_rows):
    """Pick (bags_per_block, padded_bag_count) with TPU-legal, non-degenerate blocks.

    Legality: rows = bpb*n_inst_pad within the row budget, and bpb a multiple of 8
    (f32 output sublanes) or equal to the (padded) bag count.  Prefers >=2 grid steps
    so v7x's second TensorCore gets work (parallel bag axis)."""
    def divisors(n):
        return [c for c in range(1, n + 1) if n % c == 0]

    def pick(cands, total):
        multi = [c for c in cands if total // c >= 2]
        return max(multi) if multi else max(cands)

    cands = [c for c in divisors(n_bags)
             if c * n_inst_pad <= max_rows and (c % 8 == 0 or c == n_bags)]
    if cands:
        return pick(cands, n_bags), n_bags

    # Awkward bag count (e.g. prime with B*N over budget): pad bags to a multiple
    # of 8 and retile instead of degrading to tiny / illegal blocks.
    b_pad = ((n_bags + 7) // 8) * 8
    cands = [c for c in divisors(b_pad)
             if c % 8 == 0 and c * n_inst_pad <= max_rows]
    if cands:
        return pick(cands, b_pad), b_pad
    return 8, b_pad   # huge-N fallback: 8 bags/step (may exceed the soft row budget)


@functools.partial(jax.jit, static_argnames=("max_rows_per_step",))
def mi_net_forward(x, prepared_params, *, max_rows_per_step=2048):
    """x: (B, N, D) f32 — B bags of N instances. Returns (B, 1) sigmoid probs."""
    w1b, b1, w2b, b2, w3p, b3p, wfp, bf = prepared_params
    B, N, D = x.shape

    # Pad the instance axis to a multiple of 8 with copies of instance 0 (duplicates
    # never change the max-pool), keeping the in-kernel reshape vreg-tile aligned.
    n_pad = ((N + 7) // 8) * 8
    if n_pad != N:
        dup = jnp.broadcast_to(x[:, :1, :], (B, n_pad - N, D))
        x = jnp.concatenate([x, dup], axis=1)

    bpb, b_pad = _select_tiling(B, n_pad, max_rows_per_step)
    if b_pad != B:
        x = jnp.concatenate(
            [x, jnp.zeros((b_pad - B, n_pad, D), x.dtype)], axis=0)

    rows = bpb * n_pad
    grid = (b_pad // bpb,)

    x2d = x.reshape(b_pad * n_pad, D)     # f32; cast to bf16 inside the kernel

    flops = 2 * b_pad * n_pad * (D * H1 + H1 * H2 + H2 * H3_PAD) + 2 * b_pad * H3_PAD
    bytes_accessed = (x2d.size * 4 + w1b.size * 2 + w2b.size * 2 + w3p.size * 2
                      + (b1.size + b2.size + b3p.size + wfp.size + bf.size) * 4
                      + b_pad * LANES * 4)

    kernel = functools.partial(mi_net_kernel, bags_per_block=bpb, n_inst=n_pad)
    const2d = lambda shape: pl.BlockSpec(shape, lambda i: (0, 0))  # VMEM-resident

    out = pl.pallas_call(
        kernel,
        out_shape=jax.ShapeDtypeStruct((b_pad, LANES), jnp.float32),
        grid=grid,
        in_specs=[
            pl.BlockSpec((rows, D), lambda i: (i, 0)),     # streamed activations
            const2d((D, H1)), const2d((1, H1)),            # W1, b1 (resident)
            const2d((H1, H2)), const2d((1, H2)),           # W2, b2
            const2d((H2, H3_PAD)), const2d((1, H3_PAD)),   # W3, b3 (padded)
            const2d((1, H3_PAD)),                          # wf (padded, f32)
            pl.BlockSpec(memory_space=pltpu.MemorySpace.SMEM),   # bf scalar
        ],
        out_specs=pl.BlockSpec((bpb, LANES), lambda i: (i, 0)),
        compiler_params=pltpu.CompilerParams(
            dimension_semantics=("parallel",)),
        cost_estimate=pl.CostEstimate(
            flops=flops, transcendentals=b_pad, bytes_accessed=bytes_accessed),
    )(x2d, w1b, b1, w2b, b2, w3p, b3p, wfp, bf)

    return out[:B, :1]


def init_params(key, num_input):
    """Deterministic synthetic parameters; weights stored (in, out)."""
    ks = jax.random.split(key, 8)

    def lin(kw, kb, fan_in, fan_out):
        scale = 1.0 / jnp.sqrt(jnp.float32(fan_in))
        w = jax.random.uniform(kw, (fan_in, fan_out), jnp.float32, -scale, scale)
        b = jax.random.uniform(kb, (1, fan_out), jnp.float32, -scale, scale)
        return w, b

    w1, b1 = lin(ks[0], ks[1], num_input, H1)
    w2, b2 = lin(ks[2], ks[3], H1, H2)
    w3, b3 = lin(ks[4], ks[5], H2, H3)
    wf, bf = lin(ks[6], ks[7], H3, 1)
    return (w1, b1, w2, b2, w3, b3, wf, bf)


def reference_forward(x, params):
    """Pure-JAX f32 reference (PyTorch semantics), batched over bags."""
    w1, b1, w2, b2, w3, b3, wf, bf = params
    B, N, D = x.shape
    h = x.reshape(B * N, D)
    h = jax.nn.relu(h @ w1 + b1)
    h = jax.nn.relu(h @ w2 + b2)
    h = jax.nn.relu(h @ w3 + b3)                      # (B*N, 64)
    pooled = jnp.max(h.reshape(B, N, H3), axis=1)     # (B, 64) max over instances
    return jax.nn.sigmoid(pooled @ wf + bf)           # (B, 1)


if __name__ == "__main__":
    num_input = 128     # feature dim per instance
    n_inst = 8          # instances per bag
    n_bags = 128        # bags batched into one kernel call (grid of 2 x 512 rows)

    key = jax.random.PRNGKey(0)
    kx, kp = jax.random.split(key)
    x = jax.random.normal(kx, (n_bags, n_inst, num_input), jnp.float32)
    params = init_params(kp, num_input)

    # One-time weight preprocessing (bf16 + lane padding), cached across calls.
    prepared = jax.block_until_ready(prepare_params(params))

    out = jax.block_until_ready(mi_net_forward(x, prepared))
    ref = reference_forward(x, params)

    assert out.shape == (n_bags, 1), out.shape
    max_err = float(jnp.max(jnp.abs(out - ref)))
    assert max_err < 2e-2, (max_err, out[:4], ref[:4])   # bf16-operand tolerance
    print("KERNEL_OK")
</pallas_src>

<mosaic_0001>
module attributes {stable_mosaic.version = 11 : i64} {
  func.func @mi_net_kernel(%arg0: i32, %arg1: memref<512x128xf32, #tpu.memory_space<vmem>>, %arg2: memref<128x256xbf16, #tpu.memory_space<vmem>>, %arg3: memref<1x256xf32, #tpu.memory_space<vmem>>, %arg4: memref<256x128xbf16, #tpu.memory_space<vmem>>, %arg5: memref<1x128xf32, #tpu.memory_space<vmem>>, %arg6: memref<128x128xbf16, #tpu.memory_space<vmem>>, %arg7: memref<1x128xf32, #tpu.memory_space<vmem>>, %arg8: memref<1x128xf32, #tpu.memory_space<vmem>>, %arg9: memref<1x1xf32, #tpu.memory_space<smem>>, %arg10: memref<64x128xf32, #tpu.memory_space<vmem>>) attributes {dimension_semantics = [#tpu.dimension_semantics<parallel>], iteration_bounds = array<i64: 2>, scalar_prefetch = 0 : i64, scratch_operands = 0 : i64, tpu.core_type = #tpu.core_type<tc>, window_params = [{transform_indices = @transform_0, window_bounds = array<i64: 512, 128>}, {pipeline_mode = #tpu.pipeline_mode<synchronous>, transform_indices = @transform_1, window_bounds = array<i64: 128, 256>}, {pipeline_mode = #tpu.pipeline_mode<synchronous>, transform_indices = @transform_2, window_bounds = array<i64: 1, 256>}, {pipeline_mode = #tpu.pipeline_mode<synchronous>, transform_indices = @transform_3, window_bounds = array<i64: 256, 128>}, {pipeline_mode = #tpu.pipeline_mode<synchronous>, transform_indices = @transform_4, window_bounds = array<i64: 1, 128>}, {pipeline_mode = #tpu.pipeline_mode<synchronous>, transform_indices = @transform_5, window_bounds = array<i64: 128, 128>}, {pipeline_mode = #tpu.pipeline_mode<synchronous>, transform_indices = @transform_6, window_bounds = array<i64: 1, 128>}, {pipeline_mode = #tpu.pipeline_mode<synchronous>, transform_indices = @transform_7, window_bounds = array<i64: 1, 128>}, {transform_indices = @transform_8, window_bounds = array<i64: 1, 1>}, {transform_indices = @transform_9, window_bounds = array<i64: 64, 128>}]} {
    %c0 = arith.constant 0 : index
    %c0_0 = arith.constant 0 : index
    %0 = vector.load %arg1[%c0, %c0_0] : memref<512x128xf32, #tpu.memory_space<vmem>>, vector<512x128xf32>
    %1 = arith.truncf %0 : vector<512x128xf32> to vector<512x128xbf16>
    %c0_1 = arith.constant 0 : index
    %c0_2 = arith.constant 0 : index
    %2 = vector.load %arg2[%c0_1, %c0_2] : memref<128x256xbf16, #tpu.memory_space<vmem>>, vector<128x256xbf16>
    %cst = arith.constant dense<0.000000e+00> : vector<512x256xf32>
    %3 = tpu.matmul %1, %2, %cst {dimension_numbers = #tpu.dot_dimension_numbers<[1], [0], [0], [1], [0, 0, 1, 1], [], []>} : vector<512x128xbf16>, vector<128x256xbf16>, vector<512x256xf32> -> vector<512x256xf32>
    %c0_3 = arith.constant 0 : index
    %c0_4 = arith.constant 0 : index
    %4 = vector.load %arg3[%c0_3, %c0_4] : memref<1x256xf32, #tpu.memory_space<vmem>>, vector<1x256xf32>
    %5 = vector.broadcast %4 : vector<1x256xf32> to vector<512x256xf32>
    %6 = arith.addf %3, %5 : vector<512x256xf32>
    %cst_5 = arith.constant 0.000000e+00 : f32
    %7 = vector.broadcast %cst_5 : f32 to vector<512x256xf32>
    %8 = arith.maximumf %6, %7 : vector<512x256xf32>
    %9 = arith.truncf %8 : vector<512x256xf32> to vector<512x256xbf16>
    %c0_6 = arith.constant 0 : index
    %c0_7 = arith.constant 0 : index
    %10 = vector.load %arg4[%c0_6, %c0_7] : memref<256x128xbf16, #tpu.memory_space<vmem>>, vector<256x128xbf16>
    %cst_8 = arith.constant dense<0.000000e+00> : vector<512x128xf32>
    %11 = tpu.matmul %9, %10, %cst_8 {dimension_numbers = #tpu.dot_dimension_numbers<[1], [0], [0], [1], [0, 0, 1, 1], [], []>} : vector<512x256xbf16>, vector<256x128xbf16>, vector<512x128xf32> -> vector<512x128xf32>
    %c0_9 = arith.constant 0 : index
    %c0_10 = arith.constant 0 : index
    %12 = vector.load %arg5[%c0_9, %c0_10] : memref<1x128xf32, #tpu.memory_space<vmem>>, vector<1x128xf32>
    %13 = vector.broadcast %12 : vector<1x128xf32> to vector<512x128xf32>
    %14 = arith.addf %11, %13 : vector<512x128xf32>
    %cst_11 = arith.constant 0.000000e+00 : f32
    %15 = vector.broadcast %cst_11 : f32 to vector<512x128xf32>
    %16 = arith.maximumf %14, %15 : vector<512x128xf32>
    %17 = arith.truncf %16 : vector<512x128xf32> to vector<512x128xbf16>
    %c0_12 = arith.constant 0 : index
    %c0_13 = arith.constant 0 : index
    %18 = vector.load %arg6[%c0_12, %c0_13] : memref<128x128xbf16, #tpu.memory_space<vmem>>, vector<128x128xbf16>
    %cst_14 = arith.constant dense<0.000000e+00> : vector<512x128xf32>
    %19 = tpu.matmul %17, %18, %cst_14 {dimension_numbers = #tpu.dot_dimension_numbers<[1], [0], [0], [1], [0, 0, 1, 1], [], []>} : vector<512x128xbf16>, vector<128x128xbf16>, vector<512x128xf32> -> vector<512x128xf32>
    %c0_15 = arith.constant 0 : index
    %c0_16 = arith.constant 0 : index
    %20 = vector.load %arg7[%c0_15, %c0_16] : memref<1x128xf32, #tpu.memory_space<vmem>>, vector<1x128xf32>
    %21 = vector.broadcast %20 : vector<1x128xf32> to vector<512x128xf32>
    %22 = arith.addf %19, %21 : vector<512x128xf32>
    %cst_17 = arith.constant 0.000000e+00 : f32
    %23 = vector.broadcast %cst_17 : f32 to vector<512x128xf32>
    %24 = arith.maximumf %22, %23 : vector<512x128xf32>
    %25 = vector.shape_cast %24 : vector<512x128xf32> to vector<64x8x128xf32>
    %cst_18 = arith.constant dense<0xFF800000> : vector<64x128xf32>
    %26 = vector.multi_reduction <maximumf>, %25, %cst_18 [1] : vector<64x8x128xf32> to vector<64x128xf32>
    %c0_19 = arith.constant 0 : index
    %c0_20 = arith.constant 0 : index
    %27 = vector.load %arg8[%c0_19, %c0_20] : memref<1x128xf32, #tpu.memory_space<vmem>>, vector<1x128xf32>
    %28 = vector.broadcast %27 : vector<1x128xf32> to vector<64x128xf32>
    %29 = arith.mulf %26, %28 : vector<64x128xf32>
    %cst_21 = arith.constant dense<0.000000e+00> : vector<64xf32>
    %30 = vector.multi_reduction <add>, %29, %cst_21 [1] : vector<64x128xf32> to vector<64xf32>
    %31 = vector.shape_cast %30 : vector<64xf32> to vector<64x1xf32>
    %c0_22 = arith.constant 0 : index
    %c0_23 = arith.constant 0 : index
    %32 = memref.load %arg9[%c0_22, %c0_23] : memref<1x1xf32, #tpu.memory_space<smem>>
    %33 = vector.broadcast %32 : f32 to vector<64x1xf32>
    %34 = arith.addf %31, %33 : vector<64x1xf32>
    %35 = arith.negf %34 : vector<64x1xf32>
    %36 = math.exp %35 : vector<64x1xf32>
    %cst_24 = arith.constant 1.000000e+00 : f32
    %37 = vector.broadcast %cst_24 : f32 to vector<64x1xf32>
    %38 = arith.addf %37, %36 : vector<64x1xf32>
    %39 = arith.divf %37, %38 : vector<64x1xf32>
    %40 = vector.shape_cast %39 : vector<64x1xf32> to vector<64x1xf32>
    %41 = vector.broadcast %40 : vector<64x1xf32> to vector<64x128xf32>
    %c0_25 = arith.constant 0 : index
    %c0_26 = arith.constant 0 : index
    %42 = vector.load %arg10[%c0_25, %c0_26] : memref<64x128xf32, #tpu.memory_space<vmem>>, vector<64x128xf32>
    tpu.vector_store %arg10[%c0_25, %c0_26], %41 {strides = array<i32>} : memref<64x128xf32, #tpu.memory_space<vmem>>, vector<64x128xf32>,
    return
  }
  func.func @transform_0(%arg0: i32) -> (i32, i32) {
    %c0_i32 = arith.constant 0 : i32
    %c0_i32_0 = arith.constant 0 : i32
    return %arg0, %c0_i32 : i32, i32
  }
  func.func @transform_1(%arg0: i32) -> (i32, i32) {
    %c0_i32 = arith.constant 0 : i32
    %c0_i32_0 = arith.constant 0 : i32
    %c0_i32_1 = arith.constant 0 : i32
    return %c0_i32, %c0_i32_0 : i32, i32
  }
  func.func @transform_2(%arg0: i32) -> (i32, i32) {
    %c0_i32 = arith.constant 0 : i32
    %c0_i32_0 = arith.constant 0 : i32
    %c0_i32_1 = arith.constant 0 : i32
    return %c0_i32, %c0_i32_0 : i32, i32
  }
  func.func @transform_3(%arg0: i32) -> (i32, i32) {
    %c0_i32 = arith.constant 0 : i32
    %c0_i32_0 = arith.constant 0 : i32
    %c0_i32_1 = arith.constant 0 : i32
    return %c0_i32, %c0_i32_0 : i32, i32
  }
  func.func @transform_4(%arg0: i32) -> (i32, i32) {
    %c0_i32 = arith.constant 0 : i32
    %c0_i32_0 = arith.constant 0 : i32
    %c0_i32_1 = arith.constant 0 : i32
    return %c0_i32, %c0_i32_0 : i32, i32
  }
  func.func @transform_5(%arg0: i32) -> (i32, i32) {
    %c0_i32 = arith.constant 0 : i32
    %c0_i32_0 = arith.constant 0 : i32
    %c0_i32_1 = arith.constant 0 : i32
    return %c0_i32, %c0_i32_0 : i32, i32
  }
  func.func @transform_6(%arg0: i32) -> (i32, i32) {
    %c0_i32 = arith.constant 0 : i32
    %c0_i32_0 = arith.constant 0 : i32
    %c0_i32_1 = arith.constant 0 : i32
    return %c0_i32, %c0_i32_0 : i32, i32
  }
  func.func @transform_7(%arg0: i32) -> (i32, i32) {
    %c0_i32 = arith.constant 0 : i32
    %c0_i32_0 = arith.constant 0 : i32
    %c0_i32_1 = arith.constant 0 : i32
    return %c0_i32, %c0_i32_0 : i32, i32
  }
  func.func @transform_8(%arg0: i32) -> (i32, i32) {
    %c0_i32 = arith.constant 0 : i32
    %c0_i32_0 = arith.constant 0 : i32
    %c0_i32_1 = arith.constant 0 : i32
    return %c0_i32, %c0_i32_0 : i32, i32
  }
  func.func @transform_9(%arg0: i32) -> (i32, i32) {
    %c0_i32 = arith.constant 0 : i32
    %c0_i32_0 = arith.constant 0 : i32
    return %arg0, %c0_i32 : i32, i32
  }
}

</mosaic_0001>

<llo_original>
// kernel: mi_net_forward.1
$region0: #{mi_net_forward.1}
  #allocation0 [shape = 'u32[]', space=smem, size = 0x4, offset = 0x4, fixed_abs, tag = 'smem constant byte address 0x4 - core index']
  #allocation1 [shape = 'u32[72,128]{1,0:T(1,128)}', space=vmem, size = 0x9000, scoped, tag = 'internal scratch']
  #allocation2 [shape = 'f32[1,1]{1,0:T(1,128)S(6)}', space=smem, size = 0x200, scoped, tag = 'scoped memory for mi_net_forward.1']
  %s0 = inlined_call_operand.hbm [shape: f32[1024,128], index: 0, kind: input, shape index: {}]
  %s1 = inlined_call_operand.hbm [shape: bf16[128,256], index: 1, kind: input, shape index: {}]
  %s2 = inlined_call_operand.vmem [shape: f32[1,256], index: 2, kind: input, shape index: {}]
  %s3 = inlined_call_operand.hbm [shape: bf16[256,128], index: 3, kind: input, shape index: {}]
  %s4 = inlined_call_operand.vmem [shape: f32[1,128], index: 4, kind: input, shape index: {}]
  %s5 = inlined_call_operand.hbm [shape: bf16[128,128], index: 5, kind: input, shape index: {}]
  %s6 = inlined_call_operand.vmem [shape: f32[1,128], index: 6, kind: input, shape index: {}]
  %s7 = inlined_call_operand.vmem [shape: f32[1,128], index: 7, kind: input, shape index: {}]
  %s8 = inlined_call_operand.<no memory space> [shape: f32[1,1], index: 8, kind: input, shape index: {}]
  %s9 = inlined_call_operand.vmem [shape: f32[128,128], index: 9, kind: output, shape index: {}]
  %s10 = sld [smem:[#allocation0]]
  $region85: #{mi_net_forward.1} parent=0
    _
  %s12 = ssub.s32 1, %s10
  %s13 = scalar_select 0, %s12, %s10
  %14 = sst [smem:[#allocation2]] %s8
  $region1: #{mi_net_forward.1} parent=0
    #allocation3 [shape = 'u8[524288]{0}', space=vmem, size = 0x80000, scoped, tag = 'input window, operand 0']
    #allocation4 [shape = 's32[2]{0}', space=sflag, size = 0x8, scoped, tag = 'scoped memory for mi_net_forward.1']
    #allocation5 [shape = 'u8[65536]{0}', space=vmem, size = 0x10000, scoped, tag = 'input window, operand 1, single buffered']
    #allocation6 [shape = 's32[1]{0}', space=sflag, size = 0x4, scoped, tag = 'scoped memory for mi_net_forward.1']
    #allocation7 [shape = 'u8[65536]{0}', space=vmem, size = 0x10000, scoped, tag = 'input window, operand 3, single buffered']
    #allocation8 [shape = 'u8[32768]{0}', space=vmem, size = 0x8000, scoped, tag = 'input window, operand 5, single buffered']
    #allocation9 [shape = 's32[1]{0}', space=sflag, size = 0x4, scoped, tag = 'scoped memory for mi_net_forward.1']
    %15 = vsyncpa [#allocation4], 0
    %s16 = scalar_lea.sflag [#allocation4], 1
    %17 = vsyncpa %s16, 0
    %18 = vsyncpa [#allocation6], 0
    %19 = vsyncpa [#allocation9], 0
    loop: start=0, step=1, limit=4
    $region2: #{mi_net_forward.1} parent=1 // loop_pre_header
      _
    $region3: #{mi_net_forward.1} parent=1 // loop_header
      %s21 = sphi 0, %s25
      %p22 = scmp.ge.s32.totalorder %s21, 4
      %s31 = sphi 0, %s33
      %s34 = sphi 0, %s31
      %s35 = sphi 0, %s34
      %s51 = sphi 0, %s35
      %s55 = sphi 0, %s55
      %s57 = sphi 0, %s55
      %s58 = sphi 0, %s57
      %s72 = sphi 0, %s58
      %s76 = sphi 0, %s76
      %s78 = sphi 0, %s76
      %s79 = sphi 0, %s78
      %s93 = sphi 0, %s79
      %s97 = sphi 0, %s97
      %s99 = sphi 0, %s97
      %s100 = sphi 0, %s99
      %s114 = sphi 0, %s100
      %s118 = sphi 0, %s118
      %s120 = sphi 0, %s118
      %s121 = sphi 0, %s120
      %s135 = sphi 0, %s121
      %s139 = sphi 0, %s139
      %s141 = sphi 0, %s139
      %s142 = sphi 0, %s141
      %s156 = sphi 0, %s142
      %s160 = sphi 0, %s160
      %s162 = sphi 0, %s160
      %s163 = sphi 0, %s162
      %s177 = sphi 0, %s163
      %s181 = sphi 0, %s181
      %s183 = sphi 0, %s181
      %s184 = sphi 0, %s183
      %s198 = sphi 0, %s184
      %s202 = sphi 0, %s202
      %s204 = sphi 0, %s202
      %s205 = sphi 0, %s204
      %s219 = sphi 0, %s205
      %s225 = sphi 0, %s227
      %s228 = sphi 0, %s225
      %s229 = sphi 0, %s228
      %s245 = sphi 0, %s229
    $region4: #{mi_net_forward.1} parent=1 // loop_header_branch
      %24 = sbr.rel (%p22) target = $region8
    $region5: #{mi_net_forward.1} parent=1 // loop_body
      %s26 = ssub.s32 %s21, 1
      %s27 = ssub.s32 %s21, 2
      %s28 = sadd.s32 %s21, 1
      %s29 = ssub.s32 %s21, %s28
      %p30 = scmp.eq.s32.totalorder %s29, 0
      %s32 = sadd.s32 %s31, 1
      %s33 = scalar_select %p30, %s31, %s32
      %p36 = pneg %p30
      %p37 = scmp.eq.s32.totalorder %s21, 1
      %p38 = por %p36, %p37
      %p39 = scmp.ne.s32.totalorder %s31, %s34
      %p40 = scmp.eq.s32.totalorder %s21, 0
      %p41 = por %p39, %p40
      %p42 = scmp.ne.s32.totalorder %s31, %s34
      %p43 = scmp.eq.s32.totalorder %s26, 1
      %p44 = por %p42, %p43
      %p45 = scmp.ne.s32.totalorder %s34, %s35
      %p46 = scmp.eq.s32.totalorder %s26, 0
      %p47 = por %p45, %p46
      %p48 = scmp.ne.s32.totalorder %s34, %s35
      %p49 = scmp.eq.s32.totalorder %s27, 1
      %p50 = por %p48, %p49
      %p52 = scmp.ne.s32.totalorder %s35, %s51
      %p53 = scmp.eq.s32.totalorder %s27, 0
      %p54 = por %p52, %p53
      %s56 = sadd.s32 %s55, 1
      %p59 = scmp.eq.s32.totalorder %s21, 1
      %p60 = scmp.ne.s32.totalorder %s55, %s57
      %p61 = scmp.eq.s32.totalorder %s21, 0
      %p62 = por %p60, %p61
      %p63 = scmp.ne.s32.totalorder %s55, %s57
      %p64 = scmp.eq.s32.totalorder %s26, 1
      %p65 = por %p63, %p64
      %p66 = scmp.ne.s32.totalorder %s57, %s58
      %p67 = scmp.eq.s32.totalorder %s26, 0
      %p68 = por %p66, %p67
      %p69 = scmp.ne.s32.totalorder %s57, %s58
      %p70 = scmp.eq.s32.totalorder %s27, 1
      %p71 = por %p69, %p70
      %p73 = scmp.ne.s32.totalorder %s58, %s72
      %p74 = scmp.eq.s32.totalorder %s27, 0
      %p75 = por %p73, %p74
      %s77 = sadd.s32 %s76, 1
      %p80 = scmp.eq.s32.totalorder %s21, 1
      %p81 = scmp.ne.s32.totalorder %s76, %s78
      %p82 = scmp.eq.s32.totalorder %s21, 0
      %p83 = por %p81, %p82
      %p84 = scmp.ne.s32.totalorder %s76, %s78
      %p85 = scmp.eq.s32.totalorder %s26, 1
      %p86 = por %p84, %p85
      %p87 = scmp.ne.s32.totalorder %s78, %s79
      %p88 = scmp.eq.s32.totalorder %s26, 0
      %p89 = por %p87, %p88
      %p90 = scmp.ne.s32.totalorder %s78, %s79
      %p91 = scmp.eq.s32.totalorder %s27, 1
      %p92 = por %p90, %p91
      %p94 = scmp.ne.s32.totalorder %s79, %s93
      %p95 = scmp.eq.s32.totalorder %s27, 0
      %p96 = por %p94, %p95
      %s98 = sadd.s32 %s97, 1
      %p101 = scmp.eq.s32.totalorder %s21, 1
      %p102 = scmp.ne.s32.totalorder %s97, %s99
      %p103 = scmp.eq.s32.totalorder %s21, 0
      %p104 = por %p102, %p103
      %p105 = scmp.ne.s32.totalorder %s97, %s99
      %p106 = scmp.eq.s32.totalorder %s26, 1
      %p107 = por %p105, %p106
      %p108 = scmp.ne.s32.totalorder %s99, %s100
      %p109 = scmp.eq.s32.totalorder %s26, 0
      %p110 = por %p108, %p109
      %p111 = scmp.ne.s32.totalorder %s99, %s100
      %p112 = scmp.eq.s32.totalorder %s27, 1
      %p113 = por %p111, %p112
      %p115 = scmp.ne.s32.totalorder %s100, %s114
      %p116 = scmp.eq.s32.totalorder %s27, 0
      %p117 = por %p115, %p116
      %s119 = sadd.s32 %s118, 1
      %p122 = scmp.eq.s32.totalorder %s21, 1
      %p123 = scmp.ne.s32.totalorder %s118, %s120
      %p124 = scmp.eq.s32.totalorder %s21, 0
      %p125 = por %p123, %p124
      %p126 = scmp.ne.s32.totalorder %s118, %s120
      %p127 = scmp.eq.s32.totalorder %s26, 1
      %p128 = por %p126, %p127
      %p129 = scmp.ne.s32.totalorder %s120, %s121
      %p130 = scmp.eq.s32.totalorder %s26, 0
      %p131 = por %p129, %p130
      %p132 = scmp.ne.s32.totalorder %s120, %s121
      %p133 = scmp.eq.s32.totalorder %s27, 1
      %p134 = por %p132, %p133
      %p136 = scmp.ne.s32.totalorder %s121, %s135
      %p137 = scmp.eq.s32.totalorder %s27, 0
      %p138 = por %p136, %p137
      %s140 = sadd.s32 %s139, 1
      %p143 = scmp.eq.s32.totalorder %s21, 1
      %p144 = scmp.ne.s32.totalorder %s139, %s141
      %p145 = scmp.eq.s32.totalorder %s21, 0
      %p146 = por %p144, %p145
      %p147 = scmp.ne.s32.totalorder %s139, %s141
      %p148 = scmp.eq.s32.totalorder %s26, 1
      %p149 = por %p147, %p148
      %p150 = scmp.ne.s32.totalorder %s141, %s142
      %p151 = scmp.eq.s32.totalorder %s26, 0
      %p152 = por %p150, %p151
      %p153 = scmp.ne.s32.totalorder %s141, %s142
      %p154 = scmp.eq.s32.totalorder %s27, 1
      %p155 = por %p153, %p154
      %p157 = scmp.ne.s32.totalorder %s142, %s156
      %p158 = scmp.eq.s32.totalorder %s27, 0
      %p159 = por %p157, %p158
      %s161 = sadd.s32 %s160, 1
      %p164 = scmp.eq.s32.totalorder %s21, 1
      %p165 = scmp.ne.s32.totalorder %s160, %s162
      %p166 = scmp.eq.s32.totalorder %s21, 0
      %p167 = por %p165, %p166
      %p168 = scmp.ne.s32.totalorder %s160, %s162
      %p169 = scmp.eq.s32.totalorder %s26, 1
      %p170 = por %p168, %p169
      %p171 = scmp.ne.s32.totalorder %s162, %s163
      %p172 = scmp.eq.s32.totalorder %s26, 0
      %p173 = por %p171, %p172
      %p174 = scmp.ne.s32.totalorder %s162, %s163
      %p175 = scmp.eq.s32.totalorder %s27, 1
      %p176 = por %p174, %p175
      %p178 = scmp.ne.s32.totalorder %s163, %s177
      %p179 = scmp.eq.s32.totalorder %s27, 0
      %p180 = por %p178, %p179
      %s182 = sadd.s32 %s181, 1
      %p185 = scmp.eq.s32.totalorder %s21, 1
      %p186 = scmp.ne.s32.totalorder %s181, %s183
      %p187 = scmp.eq.s32.totalorder %s21, 0
      %p188 = por %p186, %p187
      %p189 = scmp.ne.s32.totalorder %s181, %s183
      %p190 = scmp.eq.s32.totalorder %s26, 1
      %p191 = por %p189, %p190
      %p192 = scmp.ne.s32.totalorder %s183, %s184
      %p193 = scmp.eq.s32.totalorder %s26, 0
      %p194 = por %p192, %p193
      %p195 = scmp.ne.s32.totalorder %s183, %s184
      %p196 = scmp.eq.s32.totalorder %s27, 1
      %p197 = por %p195, %p196
      %p199 = scmp.ne.s32.totalorder %s184, %s198
      %p200 = scmp.eq.s32.totalorder %s27, 0
      %p201 = por %p199, %p200
      %s203 = sadd.s32 %s202, 1
      %p206 = scmp.eq.s32.totalorder %s21, 1
      %p207 = scmp.ne.s32.totalorder %s202, %s204
      %p208 = scmp.eq.s32.totalorder %s21, 0
      %p209 = por %p207, %p208
      %p210 = scmp.ne.s32.totalorder %s202, %s204
      %p211 = scmp.eq.s32.totalorder %s26, 1
      %p212 = por %p210, %p211
      %p213 = scmp.ne.s32.totalorder %s204, %s205
      %p214 = scmp.eq.s32.totalorder %s26, 0
      %p215 = por %p213, %p214
      %p216 = scmp.ne.s32.totalorder %s204, %s205
      %p217 = scmp.eq.s32.totalorder %s27, 1
      %p218 = por %p216, %p217
      %p220 = scmp.ne.s32.totalorder %s205, %s219
      %p221 = scmp.eq.s32.totalorder %s27, 0
      %p222 = por %p220, %p221
      %s223 = ssub.s32 %s21, %s28
      %p224 = scmp.eq.s32.totalorder %s223, 0
      %s226 = sadd.s32 %s225, 1
      %s227 = scalar_select %p224, %s225, %s226
      %p230 = pneg %p224
      %p231 = scmp.eq.s32.totalorder %s21, 1
      %p232 = por %p230, %p231
      %p233 = scmp.ne.s32.totalorder %s225, %s228
      %p234 = scmp.eq.s32.totalorder %s21, 0
      %p235 = por %p233, %p234
      %p236 = scmp.ne.s32.totalorder %s225, %s228
      %p237 = scmp.eq.s32.totalorder %s26, 1
      %p238 = por %p236, %p237
      %p239 = scmp.ne.s32.totalorder %s228, %s229
      %p240 = scmp.eq.s32.totalorder %s26, 0
      %p241 = por %p239, %p240
      %p242 = scmp.ne.s32.totalorder %s228, %s229
      %p243 = scmp.eq.s32.totalorder %s27, 1
      %p244 = por %p242, %p243
      %p246 = scmp.ne.s32.totalorder %s229, %s245
      %p247 = scmp.eq.s32.totalorder %s27, 0
      %p248 = por %p246, %p247
      %p249 = scmp.le.s32.totalorder 1, %s21
      %p250 = scmp.lt.s32.totalorder %s21, 3
      %p251 = pnand %p249, %p250
      %p252 = pneg %p251
      // Predicated region
      $region9: #{mi_net_forward.1} parent=5 // pred_check
        _
      $region10: #{mi_net_forward.1} parent=5 // pred_check_branch
        %254 = sbr.rel (%p251) target = $region12
      $region11: #{mi_net_forward.1} parent=5 // pred_region
        %s255 = ssub.s32 %s21, 1
        // Predicated region
        $region13: #{mi_net_forward.1} parent=11 // pred_check
          %p256 = pneg %p68
        $region14: #{mi_net_forward.1} parent=11 // pred_check_branch
          %258 = sbr.rel (%p256) target = $region16
        $region15: #{mi_net_forward.1} parent=11 // pred_region
          %260 = vsyncadd [#allocation6], 0
          %s261 = sshll.u32 %s1, 4
          %s262 = int_to_ptr.hbm [resolvable:$true] %s261
          %s263 = sshll.u32 [#allocation5], 4
          %s264 = int_to_ptr.vmem [resolvable:$true] %s263
          %269 = dma.hbm_to_vmem [thread:$0]  %s262, 2048, %s264, [#allocation6], 128, 128, 8
        $region16: #{mi_net_forward.1} parent=11 // pred_fallthru
          _
        // Predicated region
        $region17: #{mi_net_forward.1} parent=11 // pred_check
          %p270 = pneg %p89
        $region18: #{mi_net_forward.1} parent=11 // pred_check_branch
          %272 = sbr.rel (%p270) target = $region20
        $region19: #{mi_net_forward.1} parent=11 // pred_region
          _
        $region20: #{mi_net_forward.1} parent=11 // pred_fallthru
          _
        // Predicated region
        $region21: #{mi_net_forward.1} parent=11 // pred_check
          %p273 = pneg %p110
        $region22: #{mi_net_forward.1} parent=11 // pred_check_branch
          %275 = sbr.rel (%p273) target = $region24
        $region23: #{mi_net_forward.1} parent=11 // pred_region
          %277 = vsyncadd [#allocation6], 0
          %s278 = sshll.u32 %s3, 4
          %s279 = int_to_ptr.hbm [resolvable:$true] %s278
          %s280 = sshll.u32 [#allocation7], 4
          %s281 = int_to_ptr.vmem [resolvable:$true] %s280
          %286 = dma.hbm_to_vmem [thread:$0]  %s279, 2048, %s281, [#allocation6], 64, 64, 4
        $region24: #{mi_net_forward.1} parent=11 // pred_fallthru
          _
        // Predicated region
        $region25: #{mi_net_forward.1} parent=11 // pred_check
          %p287 = pneg %p131
        $region26: #{mi_net_forward.1} parent=11 // pred_check_branch
          %289 = sbr.rel (%p287) target = $region28
        $region27: #{mi_net_forward.1} parent=11 // pred_region
          _
        $region28: #{mi_net_forward.1} parent=11 // pred_fallthru
          _
        // Predicated region
        $region29: #{mi_net_forward.1} parent=11 // pred_check
          %p290 = pneg %p152
        $region30: #{mi_net_forward.1} parent=11 // pred_check_branch
          %292 = sbr.rel (%p290) target = $region32
        $region31: #{mi_net_forward.1} parent=11 // pred_region
          %294 = vsyncadd [#allocation9], 0
          %s295 = sshll.u32 %s5, 4
          %s296 = int_to_ptr.hbm [resolvable:$true] %s295
          %s297 = sshll.u32 [#allocation8], 4
          %s298 = int_to_ptr.vmem [resolvable:$true] %s297
          %303 = dma.hbm_to_vmem [thread:$0]  %s296, 1024, %s298, [#allocation9], 64, 64, 4
        $region32: #{mi_net_forward.1} parent=11 // pred_fallthru
          _
        // Predicated region
        $region33: #{mi_net_forward.1} parent=11 // pred_check
          %p304 = pneg %p173
        $region34: #{mi_net_forward.1} parent=11 // pred_check_branch
          %306 = sbr.rel (%p304) target = $region36
        $region35: #{mi_net_forward.1} parent=11 // pred_region
          _
        $region36: #{mi_net_forward.1} parent=11 // pred_fallthru
          _
        // Predicated region
        $region37: #{mi_net_forward.1} parent=11 // pred_check
          %p307 = pneg %p194
        $region38: #{mi_net_forward.1} parent=11 // pred_check_branch
          %309 = sbr.rel (%p307) target = $region40
        $region39: #{mi_net_forward.1} parent=11 // pred_region
          _
        $region40: #{mi_net_forward.1} parent=11 // pred_fallthru
          _
        // Predicated region
        $region41: #{mi_net_forward.1} parent=11 // pred_check
          %p310 = pneg %p215
        $region42: #{mi_net_forward.1} parent=11 // pred_check_branch
          %312 = sbr.rel (%p310) target = $region44
        $region43: #{mi_net_forward.1} parent=11 // pred_region
          _
        $region44: #{mi_net_forward.1} parent=11 // pred_fallthru
          _
      $region12: #{mi_net_forward.1} parent=5 // pred_fallthru
        _
      %p313 = scmp.lt.s32.totalorder %s21, 2
      // Predicated region
      $region45: #{mi_net_forward.1} parent=5 // pred_check
        %p314 = pneg %p313
      $region46: #{mi_net_forward.1} parent=5 // pred_check_branch
        %316 = sbr.rel (%p314) target = $region48
      $region47: #{mi_net_forward.1} parent=5 // pred_region
        // Predicated region
        $region49: #{mi_net_forward.1} parent=47 // pred_check
          %p317 = pneg %p41
        $region50: #{mi_net_forward.1} parent=47 // pred_check_branch
          %319 = sbr.rel (%p317) target = $region52
        $region51: #{mi_net_forward.1} parent=47 // pred_region
          %s320 = sand.u32 %s31, 1
          %s321 = scalar_lea.sflag [#allocation4], %s320
          %s322 = sand.u32 %s31, 1
          %s323 = smul.addr %s322, 512
          %s324 = scalar_lea.vmem [#allocation3], %s323
          %s325 = smul.u32 64, %s21
          %327 = vsyncadd %s321, 0
          %s328 = smul.addr %s325, 8
          %s329 = scalar_lea.hbm %s0, %s328
          %s330 = sshll.u32 %s329, 4
          %s331 = int_to_ptr.hbm [resolvable:$true] %s330
          %s332 = sshll.u32 %s324, 4
          %s333 = int_to_ptr.vmem [resolvable:$true] %s332
          %338 = dma.hbm_to_vmem [thread:$0]  %s331, 8192, %s333, %s321, 128, 128, 8
        $region52: #{mi_net_forward.1} parent=47 // pred_fallthru
          _
      $region48: #{mi_net_forward.1} parent=5 // pred_fallthru
        _
      %p339 = scmp.le.s32.totalorder 1, %s21
      %p340 = scmp.lt.s32.totalorder %s21, 3
      %p341 = pnand %p339, %p340
      %p342 = pneg %p341
      // Predicated region
      $region53: #{mi_net_forward.1} parent=5 // pred_check
        _
      $region54: #{mi_net_forward.1} parent=5 // pred_check_branch
        %344 = sbr.rel (%p341) target = $region56
      $region55: #{mi_net_forward.1} parent=5 // pred_region
        %s345 = ssub.s32 %s21, 1
        %s346 = sand.u32 %s34, 1
        %s347 = scalar_lea.sflag [#allocation4], %s346
        %s348 = sand.u32 %s34, 1
        %s349 = smul.addr %s348, 512
        %s350 = scalar_lea.vmem [#allocation3], %s349
        // Predicated region
        $region57: #{mi_net_forward.1} parent=55 // pred_check
          %p351 = pneg %p47
        $region58: #{mi_net_forward.1} parent=55 // pred_check_branch
          %353 = sbr.rel (%p351) target = $region60
        $region59: #{mi_net_forward.1} parent=55 // pred_region
          %355 = dma.done %s347, 8192
        $region60: #{mi_net_forward.1} parent=55 // pred_fallthru
          _
        // Predicated region
        $region61: #{mi_net_forward.1} parent=55 // pred_check
          %p356 = pneg %p68
        $region62: #{mi_net_forward.1} parent=55 // pred_check_branch
          %358 = sbr.rel (%p356) target = $region64
        $region63: #{mi_net_forward.1} parent=55 // pred_region
          %360 = dma.done [#allocation6], 2048
        $region64: #{mi_net_forward.1} parent=55 // pred_fallthru
          _
        // Predicated region
        $region65: #{mi_net_forward.1} parent=55 // pred_check
          %p361 = pneg %p110
        $region66: #{mi_net_forward.1} parent=55 // pred_check_branch
          %363 = sbr.rel (%p361) target = $region68
        $region67: #{mi_net_forward.1} parent=55 // pred_region
          %365 = dma.done [#allocation6], 2048
        $region68: #{mi_net_forward.1} parent=55 // pred_fallthru
          _
        // Predicated region
        $region69: #{mi_net_forward.1} parent=55 // pred_check
          %p366 = pneg %p152
        $region70: #{mi_net_forward.1} parent=55 // pred_check_branch
          %368 = sbr.rel (%p366) target = $region72
        $region71: #{mi_net_forward.1} parent=55 // pred_region
          %370 = dma.done [#allocation9], 1024
        $region72: #{mi_net_forward.1} parent=55 // pred_fallthru
          _
        %s371 = sand.u32 %s34, 1
        %s372 = scalar_lea.sflag [#allocation4], %s371
        %s373 = sand.u32 %s34, 1
        %s374 = smul.addr %s373, 512
        %s375 = scalar_lea.vmem [#allocation3], %s374
        %p376 = pneg %p47
        %p377 = pneg %p44
        %p378 = pneg %p68
        %p379 = pneg %p65
        %p380 = pneg %p89
        %p381 = pneg %p86
        %p382 = pneg %p110
        %p383 = pneg %p107
        %p384 = pneg %p131
        %p385 = pneg %p128
        %p386 = pneg %p152
        %p387 = pneg %p149
        %p388 = pneg %p173
        %p389 = pneg %p170
        %p390 = pneg %p194
        %p391 = pneg %p191
        %p392 = pneg %p215
        %p393 = pneg %p212
        %p394 = pneg %p241
        %p395 = pneg %p238
        %s396 = smul.u32 8, %s26
        %p397 = scmp.lt.s32.totalorder %s396, 15
        %s398 = scalar_select %p397, %s396, 15
        %s399 = smul.addr %s398, 8
        %s400 = scalar_lea.vmem %s9, %s399
        %s401 = smul.u32 64, %s26
        %s402 = smul.u32 8, %s26
        %p403 = scmp.lt.s32.totalorder %s402, 15
        %s404 = scalar_select %p403, %s402, 15
        %s405 = smul.addr %s404, 8
        %s406 = scalar_lea.vmem %s9, %s405
        %s407 = smul.u32 8, %s26
        %v408 = vld [vmem:[%s350] sm:$0xff]
        %v409 = vld [vmem:[%s350 + $0x8] sm:$0xff]
        %v410 = vld [vmem:[%s350 + $0x10] sm:$0xff]
        %v411 = vld [vmem:[%s350 + $0x18] sm:$0xff]
        %v412 = vld [vmem:[%s350 + $0x20] sm:$0xff]
        %v413 = vld [vmem:[%s350 + $0x28] sm:$0xff]
        %v414 = vld [vmem:[%s350 + $0x30] sm:$0xff]
        %v415 = vld [vmem:[%s350 + $0x38] sm:$0xff]
        %v416 = vld [vmem:[%s350 + $0x40] sm:$0xff]
        %v417 = vld [vmem:[%s350 + $0x48] sm:$0xff]
        %v418 = vld [vmem:[%s350 + $0x50] sm:$0xff]
        %v419 = vld [vmem:[%s350 + $0x58] sm:$0xff]
        %v420 = vld [vmem:[%s350 + $0x60] sm:$0xff]
        %v421 = vld [vmem:[%s350 + $0x68] sm:$0xff]
        %v422 = vld [vmem:[%s350 + $0x70] sm:$0xff]
        %v423 = vld [vmem:[%s350 + $0x78] sm:$0xff]
        %v424 = vld [vmem:[%s350 + $0x80] sm:$0xff]
        %v425 = vld [vmem:[%s350 + $0x88] sm:$0xff]
        %v426 = vld [vmem:[%s350 + $0x90] sm:$0xff]
        %v427 = vld [vmem:[%s350 + $0x98] sm:$0xff]
        %v428 = vld [vmem:[%s350 + $0xa0] sm:$0xff]
        %v429 = vld [vmem:[%s350 + $0xa8] sm:$0xff]
        %v430 = vld [vmem:[%s350 + $0xb0] sm:$0xff]
        %v431 = vld [vmem:[%s350 + $0xb8] sm:$0xff]
        %v432 = vld [vmem:[%s350 + $0xc0] sm:$0xff]
        %v433 = vld [vmem:[%s350 + $0xc8] sm:$0xff]
        %v434 = vld [vmem:[%s350 + $0xd0] sm:$0xff]
        %v435 = vld [vmem:[%s350 + $0xd8] sm:$0xff]
        %v436 = vld [vmem:[%s350 + $0xe0] sm:$0xff]
        %v437 = vld [vmem:[%s350 + $0xe8] sm:$0xff]
        %v438 = vld [vmem:[%s350 + $0xf0] sm:$0xff]
        %v439 = vld [vmem:[%s350 + $0xf8] sm:$0xff]
        %v440 = vld [vmem:[%s350 + $0x100] sm:$0xff]
        %v441 = vld [vmem:[%s350 + $0x108] sm:$0xff]
        %v442 = vld [vmem:[%s350 + $0x110] sm:$0xff]
        %v443 = vld [vmem:[%s350 + $0x118] sm:$0xff]
        %v444 = vld [vmem:[%s350 + $0x120] sm:$0xff]
        %v445 = vld [vmem:[%s350 + $0x128] sm:$0xff]
        %v446 = vld [vmem:[%s350 + $0x130] sm:$0xff]
        %v447 = vld [vmem:[%s350 + $0x138] sm:$0xff]
        %v448 = vld [vmem:[%s350 + $0x140] sm:$0xff]
        %v449 = vld [vmem:[%s350 + $0x148] sm:$0xff]
        %v450 = vld [vmem:[%s350 + $0x150] sm:$0xff]
        %v451 = vld [vmem:[%s350 + $0x158] sm:$0xff]
        %v452 = vld [vmem:[%s350 + $0x160] sm:$0xff]
        %v453 = vld [vmem:[%s350 + $0x168] sm:$0xff]
        %v454 = vld [vmem:[%s350 + $0x170] sm:$0xff]
        %v455 = vld [vmem:[%s350 + $0x178] sm:$0xff]
        %v456 = vld [vmem:[%s350 + $0x180] sm:$0xff]
        %v457 = vld [vmem:[%s350 + $0x188] sm:$0xff]
        %v458 = vld [vmem:[%s350 + $0x190] sm:$0xff]
        %v459 = vld [vmem:[%s350 + $0x198] sm:$0xff]
        %v460 = vld [vmem:[%s350 + $0x1a0] sm:$0xff]
        %v461 = vld [vmem:[%s350 + $0x1a8] sm:$0xff]
        %v462 = vld [vmem:[%s350 + $0x1b0] sm:$0xff]
        %v463 = vld [vmem:[%s350 + $0x1b8] sm:$0xff]
        %v464 = vld [vmem:[%s350 + $0x1c0] sm:$0xff]
        %v465 = vld [vmem:[%s350 + $0x1c8] sm:$0xff]
        %v466 = vld [vmem:[%s350 + $0x1d0] sm:$0xff]
        %v467 = vld [vmem:[%s350 + $0x1d8] sm:$0xff]
        %v468 = vld [vmem:[%s350 + $0x1e0] sm:$0xff]
        %v469 = vld [vmem:[%s350 + $0x1e8] sm:$0xff]
        %v470 = vld [vmem:[%s350 + $0x1f0] sm:$0xff]
        %v471 = vld [vmem:[%s350 + $0x1f8] sm:$0xff]
        %v472 = vpack.c.bf16 %v409, %v408
        %v473 = vpack.c.bf16 %v411, %v410
        %v474 = vpack.c.bf16 %v413, %v412
        %v475 = vpack.c.bf16 %v415, %v414
        %v476 = vpack.c.bf16 %v417, %v416
        %v477 = vpack.c.bf16 %v419, %v418
        %v478 = vpack.c.bf16 %v421, %v420
        %v479 = vpack.c.bf16 %v423, %v422
        %v480 = vpack.c.bf16 %v425, %v424
        %v481 = vpack.c.bf16 %v427, %v426
        %v482 = vpack.c.bf16 %v429, %v428
        %v483 = vpack.c.bf16 %v431, %v430
        %v484 = vpack.c.bf16 %v433, %v432
        %v485 = vpack.c.bf16 %v435, %v434
        %v486 = vpack.c.bf16 %v437, %v436
        %v487 = vpack.c.bf16 %v439, %v438
        %v488 = vpack.c.bf16 %v441, %v440
        %v489 = vpack.c.bf16 %v443, %v442
        %v490 = vpack.c.bf16 %v445, %v444
        %v491 = vpack.c.bf16 %v447, %v446
        %v492 = vpack.c.bf16 %v449, %v448
        %v493 = vpack.c.bf16 %v451, %v450
        %v494 = vpack.c.bf16 %v453, %v452
        %v495 = vpack.c.bf16 %v455, %v454
        %v496 = vpack.c.bf16 %v457, %v456
        %v497 = vpack.c.bf16 %v459, %v458
        %v498 = vpack.c.bf16 %v461, %v460
        %v499 = vpack.c.bf16 %v463, %v462
        %v500 = vpack.c.bf16 %v465, %v464
        %v501 = vpack.c.bf16 %v467, %v466
        %v502 = vpack.c.bf16 %v469, %v468
        %v503 = vpack.c.bf16 %v471, %v470
        %v504 = vld [vmem:[#allocation5] sm:$0xff]
        %v505 = vld [vmem:[#allocation5 + $0x8] sm:$0xff]
        %v506 = vld [vmem:[#allocation5 + $0x10] sm:$0xff]
        %v507 = vld [vmem:[#allocation5 + $0x18] sm:$0xff]
        %v508 = vld [vmem:[#allocation5 + $0x20] sm:$0xff]
        %v509 = vld [vmem:[#allocation5 + $0x28] sm:$0xff]
        %v510 = vld [vmem:[#allocation5 + $0x30] sm:$0xff]
        %v511 = vld [vmem:[#allocation5 + $0x38] sm:$0xff]
        %v512 = vld [vmem:[#allocation5 + $0x40] sm:$0xff]
        %v513 = vld [vmem:[#allocation5 + $0x48] sm:$0xff]
        %v514 = vld [vmem:[#allocation5 + $0x50] sm:$0xff]
        %v515 = vld [vmem:[#allocation5 + $0x58] sm:$0xff]
        %v516 = vld [vmem:[#allocation5 + $0x60] sm:$0xff]
        %v517 = vld [vmem:[#allocation5 + $0x68] sm:$0xff]
        %v518 = vld [vmem:[#allocation5 + $0x70] sm:$0xff]
        %v519 = vld [vmem:[#allocation5 + $0x78] sm:$0xff]
        %v520 = vld [vmem:[%s2] sm:$0x3]
        %v522 = vperm.slane %v520, 0
        %v523 = vperm.slane %v520, 1
        %v542 = vunpack.c.l.b16 %v504
        %v543 = vunpack.c.h.b16 %v504
        %v544 = vunpack.c.l.b16 %v505
        %v545 = vunpack.c.h.b16 %v505
        %v546 = vunpack.c.l.b16 %v506
        %v547 = vunpack.c.h.b16 %v506
        %v548 = vunpack.c.l.b16 %v507
        %v549 = vunpack.c.h.b16 %v507
        %v550 = vunpack.c.l.b16 %v508
        %v551 = vunpack.c.h.b16 %v508
        %v552 = vunpack.c.l.b16 %v509
        %v553 = vunpack.c.h.b16 %v509
        %v554 = vunpack.c.l.b16 %v510
        %v555 = vunpack.c.h.b16 %v510
        %v556 = vunpack.c.l.b16 %v511
        %v557 = vunpack.c.h.b16 %v511
        %v558 = vunpack.c.l.b16 %v512
        %v559 = vunpack.c.h.b16 %v512
        %v560 = vunpack.c.l.b16 %v513
        %v561 = vunpack.c.h.b16 %v513
        %v562 = vunpack.c.l.b16 %v514
        %v563 = vunpack.c.h.b16 %v514
        %v564 = vunpack.c.l.b16 %v515
        %v565 = vunpack.c.h.b16 %v515
        %v566 = vunpack.c.l.b16 %v516
        %v567 = vunpack.c.h.b16 %v516
        %v568 = vunpack.c.l.b16 %v517
        %v569 = vunpack.c.h.b16 %v517
        %v570 = vunpack.c.l.b16 %v518
        %v571 = vunpack.c.h.b16 %v518
        %v572 = vunpack.c.l.b16 %v519
        %v573 = vunpack.c.h.b16 %v519
        %v574 = vpack.c.b16 %v544, %v542
        %v575 = vpack.c.b16 %v545, %v543
        %v576 = vpack.c.b16 %v548, %v546
        %v577 = vpack.c.b16 %v549, %v547
        %v578 = vpack.c.b16 %v552, %v550
        %v579 = vpack.c.b16 %v553, %v551
        %v580 = vpack.c.b16 %v556, %v554
        %v581 = vpack.c.b16 %v557, %v555
        %v582 = vpack.c.b16 %v560, %v558
        %v583 = vpack.c.b16 %v561, %v559
        %v584 = vpack.c.b16 %v564, %v562
        %v585 = vpack.c.b16 %v565, %v563
        %v586 = vpack.c.b16 %v568, %v566
        %v587 = vpack.c.b16 %v569, %v567
        %v588 = vpack.c.b16 %v572, %v570
        %v589 = vpack.c.b16 %v573, %v571
        %606 = vmatpush.bf16.msra.mxu0 %v588
        %607 = vmatpush.bf16.msra.mxu0 %v586
        %608 = vmatpush.bf16.msra.mxu0 %v584
        %609 = vmatpush.bf16.msra.mxu0 %v582
        %610 = vmatpush.bf16.msra.mxu0 %v580
        %611 = vmatpush.bf16.msra.mxu0 %v578
        %612 = vmatpush.bf16.msra.mxu0 %v576
        %613 = vmatpush.bf16.msra.mxu0 %v574
        %614 = vmatmul.bf16.gmra.mxu0 %v472
        %v615 = vpop.f32.mrf.mxu0
        %v616 = vadd.f32 %v522, %v615
        %v617 = vpop.f32.mrf.mxu0
        %v618 = vadd.f32 %v522, %v617
        %619 = vmatmul.bf16.gmra.mxu0 %v473
        %v620 = vpop.f32.mrf.mxu0
        %v621 = vadd.f32 %v522, %v620
        %v622 = vpop.f32.mrf.mxu0
        %v623 = vadd.f32 %v522, %v622
        %624 = vmatmul.bf16.gmra.mxu0 %v474
        %v625 = vpop.f32.mrf.mxu0
        %v626 = vadd.f32 %v522, %v625
        %v627 = vpop.f32.mrf.mxu0
        %v628 = vadd.f32 %v522, %v627
        %629 = vmatmul.bf16.gmra.mxu0 %v475
        %v630 = vpop.f32.mrf.mxu0
        %v631 = vadd.f32 %v522, %v630
        %v632 = vpop.f32.mrf.mxu0
        %v633 = vadd.f32 %v522, %v632
        %634 = vmatmul.bf16.gmra.mxu0 %v476
        %v635 = vpop.f32.mrf.mxu0
        %v636 = vadd.f32 %v522, %v635
        %v637 = vpop.f32.mrf.mxu0
        %v638 = vadd.f32 %v522, %v637
        %639 = vmatmul.bf16.gmra.mxu0 %v477
        %v640 = vpop.f32.mrf.mxu0
        %v641 = vadd.f32 %v522, %v640
        %v642 = vpop.f32.mrf.mxu0
        %v643 = vadd.f32 %v522, %v642
        %644 = vmatmul.bf16.gmra.mxu0 %v478
        %v645 = vpop.f32.mrf.mxu0
        %v646 = vadd.f32 %v522, %v645
        %v647 = vpop.f32.mrf.mxu0
        %v648 = vadd.f32 %v522, %v647
        %649 = vmatmul.bf16.gmra.mxu0 %v479
        %v650 = vpop.f32.mrf.mxu0
        %v651 = vadd.f32 %v522, %v650
        %v652 = vpop.f32.mrf.mxu0
        %v653 = vadd.f32 %v522, %v652
        %654 = vmatmul.bf16.gmra.mxu0 %v480
        %v655 = vpop.f32.mrf.mxu0
        %v656 = vadd.f32 %v522, %v655
        %v657 = vpop.f32.mrf.mxu0
        %v658 = vadd.f32 %v522, %v657
        %659 = vmatmul.bf16.gmra.mxu0 %v481
        %v660 = vpop.f32.mrf.mxu0
        %v661 = vadd.f32 %v522, %v660
        %v662 = vpop.f32.mrf.mxu0
        %v663 = vadd.f32 %v522, %v662
        %664 = vmatmul.bf16.gmra.mxu0 %v482
        %v665 = vpop.f32.mrf.mxu0
        %v666 = vadd.f32 %v522, %v665
        %v667 = vpop.f32.mrf.mxu0
        %v668 = vadd.f32 %v522, %v667
        %669 = vmatmul.bf16.gmra.mxu0 %v483
        %v670 = vpop.f32.mrf.mxu0
        %v671 = vadd.f32 %v522, %v670
        %v672 = vpop.f32.mrf.mxu0
        %v673 = vadd.f32 %v522, %v672
        %674 = vmatmul.bf16.gmra.mxu0 %v484
        %v675 = vpop.f32.mrf.mxu0
        %v676 = vadd.f32 %v522, %v675
        %v677 = vpop.f32.mrf.mxu0
        %v678 = vadd.f32 %v522, %v677
        %679 = vmatmul.bf16.gmra.mxu0 %v485
        %v680 = vpop.f32.mrf.mxu0
        %v681 = vadd.f32 %v522, %v680
        %v682 = vpop.f32.mrf.mxu0
        %v683 = vadd.f32 %v522, %v682
        %684 = vmatmul.bf16.gmra.mxu0 %v486
        %v685 = vpop.f32.mrf.mxu0
        %v686 = vadd.f32 %v522, %v685
        %v687 = vpop.f32.mrf.mxu0
        %v688 = vadd.f32 %v522, %v687
        %689 = vmatmul.bf16.gmra.mxu0 %v487
        %v690 = vpop.f32.mrf.mxu0
        %v691 = vadd.f32 %v522, %v690
        %v692 = vpop.f32.mrf.mxu0
        %v693 = vadd.f32 %v522, %v692
        %694 = vmatmul.bf16.gmra.mxu0 %v488
        %v695 = vpop.f32.mrf.mxu0
        %v696 = vadd.f32 %v522, %v695
        %v697 = vpop.f32.mrf.mxu0
        %v698 = vadd.f32 %v522, %v697
        %699 = vmatmul.bf16.gmra.mxu0 %v489
        %v700 = vpop.f32.mrf.mxu0
        %v701 = vadd.f32 %v522, %v700
        %v702 = vpop.f32.mrf.mxu0
        %v703 = vadd.f32 %v522, %v702
        %704 = vmatmul.bf16.gmra.mxu0 %v490
        %v705 = vpop.f32.mrf.mxu0
        %v706 = vadd.f32 %v522, %v705
        %v707 = vpop.f32.mrf.mxu0
        %v708 = vadd.f32 %v522, %v707
        %709 = vmatmul.bf16.gmra.mxu0 %v491
        %v710 = vpop.f32.mrf.mxu0
        %v711 = vadd.f32 %v522, %v710
        %v712 = vpop.f32.mrf.mxu0
        %v713 = vadd.f32 %v522, %v712
        %714 = vmatmul.bf16.gmra.mxu0 %v492
        %v715 = vpop.f32.mrf.mxu0
        %v716 = vadd.f32 %v522, %v715
        %v717 = vpop.f32.mrf.mxu0
        %v718 = vadd.f32 %v522, %v717
        %719 = vmatmul.bf16.gmra.mxu0 %v493
        %v720 = vpop.f32.mrf.mxu0
        %v721 = vadd.f32 %v522, %v720
        %v722 = vpop.f32.mrf.mxu0
        %v723 = vadd.f32 %v522, %v722
        %724 = vmatmul.bf16.gmra.mxu0 %v494
        %v725 = vpop.f32.mrf.mxu0
        %v726 = vadd.f32 %v522, %v725
        %v727 = vpop.f32.mrf.mxu0
        %v728 = vadd.f32 %v522, %v727
        %729 = vmatmul.bf16.gmra.mxu0 %v495
        %v730 = vpop.f32.mrf.mxu0
        %v731 = vadd.f32 %v522, %v730
        %v732 = vpop.f32.mrf.mxu0
        %v733 = vadd.f32 %v522, %v732
        %734 = vmatmul.bf16.gmra.mxu0 %v496
        %v735 = vpop.f32.mrf.mxu0
        %v736 = vadd.f32 %v522, %v735
        %v737 = vpop.f32.mrf.mxu0
        %v738 = vadd.f32 %v522, %v737
        %739 = vmatmul.bf16.gmra.mxu0 %v497
        %v740 = vpop.f32.mrf.mxu0
        %v741 = vadd.f32 %v522, %v740
        %v742 = vpop.f32.mrf.mxu0
        %v743 = vadd.f32 %v522, %v742
        %744 = vmatmul.bf16.gmra.mxu0 %v498
        %v745 = vpop.f32.mrf.mxu0
        %v746 = vadd.f32 %v522, %v745
        %v747 = vpop.f32.mrf.mxu0
        %v748 = vadd.f32 %v522, %v747
        %749 = vmatmul.bf16.gmra.mxu0 %v499
        %v750 = vpop.f32.mrf.mxu0
        %v751 = vadd.f32 %v522, %v750
        %v752 = vpop.f32.mrf.mxu0
        %v753 = vadd.f32 %v522, %v752
        %754 = vmatmul.bf16.gmra.mxu0 %v500
        %v755 = vpop.f32.mrf.mxu0
        %v756 = vadd.f32 %v522, %v755
        %v757 = vpop.f32.mrf.mxu0
        %v758 = vadd.f32 %v522, %v757
        %759 = vmatmul.bf16.gmra.mxu0 %v501
        %v760 = vpop.f32.mrf.mxu0
        %v761 = vadd.f32 %v522, %v760
        %v762 = vpop.f32.mrf.mxu0
        %v763 = vadd.f32 %v522, %v762
        %764 = vmatmul.bf16.gmra.mxu0 %v502
        %v765 = vpop.f32.mrf.mxu0
        %v766 = vadd.f32 %v522, %v765
        %v767 = vpop.f32.mrf.mxu0
        %v768 = vadd.f32 %v522, %v767
        %769 = vmatmul.bf16.gmra.mxu0 %v503
        %v770 = vpop.f32.mrf.mxu0
        %v771 = vadd.f32 %v522, %v770
        %v772 = vpop.f32.mrf.mxu0
        %v773 = vadd.f32 %v522, %v772
        %774 = vdwg.mxu0
        %775 = vmatpush.bf16.msra.mxu0 %v589
        %776 = vmatpush.bf16.msra.mxu0 %v587
        %777 = vmatpush.bf16.msra.mxu0 %v585
        %778 = vmatpush.bf16.msra.mxu0 %v583
        %779 = vmatpush.bf16.msra.mxu0 %v581
        %780 = vmatpush.bf16.msra.mxu0 %v579
        %781 = vmatpush.bf16.msra.mxu0 %v577
        %782 = vmatpush.bf16.msra.mxu0 %v575
        %783 = vmatmul.bf16.gmra.mxu0 %v472
        %v784 = vpop.f32.mrf.mxu0
        %v785 = vadd.f32 %v523, %v784
        %v786 = vpop.f32.mrf.mxu0
        %v787 = vadd.f32 %v523, %v786
        %788 = vmatmul.bf16.gmra.mxu0 %v473
        %v789 = vpop.f32.mrf.mxu0
        %v790 = vadd.f32 %v523, %v789
        %v791 = vpop.f32.mrf.mxu0
        %v792 = vadd.f32 %v523, %v791
        %793 = vmatmul.bf16.gmra.mxu0 %v474
        %v794 = vpop.f32.mrf.mxu0
        %v795 = vadd.f32 %v523, %v794
        %v796 = vpop.f32.mrf.mxu0
        %v797 = vadd.f32 %v523, %v796
        %798 = vmatmul.bf16.gmra.mxu0 %v475
        %v799 = vpop.f32.mrf.mxu0
        %v800 = vadd.f32 %v523, %v799
        %v801 = vpop.f32.mrf.mxu0
        %v802 = vadd.f32 %v523, %v801
        %803 = vmatmul.bf16.gmra.mxu0 %v476
        %v804 = vpop.f32.mrf.mxu0
        %v805 = vadd.f32 %v523, %v804
        %v806 = vpop.f32.mrf.mxu0
        %v807 = vadd.f32 %v523, %v806
        %808 = vmatmul.bf16.gmra.mxu0 %v477
        %v809 = vpop.f32.mrf.mxu0
        %v810 = vadd.f32 %v523, %v809
        %v811 = vpop.f32.mrf.mxu0
        %v812 = vadd.f32 %v523, %v811
        %813 = vmatmul.bf16.gmra.mxu0 %v478
        %v814 = vpop.f32.mrf.mxu0
        %v815 = vadd.f32 %v523, %v814
        %v816 = vpop.f32.mrf.mxu0
        %v817 = vadd.f32 %v523, %v816
        %818 = vmatmul.bf16.gmra.mxu0 %v479
        %v819 = vpop.f32.mrf.mxu0
        %v820 = vadd.f32 %v523, %v819
        %v821 = vpop.f32.mrf.mxu0
        %v822 = vadd.f32 %v523, %v821
        %823 = vmatmul.bf16.gmra.mxu0 %v480
        %v824 = vpop.f32.mrf.mxu0
        %v825 = vadd.f32 %v523, %v824
        %v826 = vpop.f32.mrf.mxu0
        %v827 = vadd.f32 %v523, %v826
        %828 = vmatmul.bf16.gmra.mxu0 %v481
        %v829 = vpop.f32.mrf.mxu0
        %v830 = vadd.f32 %v523, %v829
        %v831 = vpop.f32.mrf.mxu0
        %v832 = vadd.f32 %v523, %v831
        %833 = vmatmul.bf16.gmra.mxu0 %v482
        %v834 = vpop.f32.mrf.mxu0
        %v835 = vadd.f32 %v523, %v834
        %v836 = vpop.f32.mrf.mxu0
        %v837 = vadd.f32 %v523, %v836
        %838 = vmatmul.bf16.gmra.mxu0 %v483
        %v839 = vpop.f32.mrf.mxu0
        %v840 = vadd.f32 %v523, %v839
        %v841 = vpop.f32.mrf.mxu0
        %v842 = vadd.f32 %v523, %v841
        %843 = vmatmul.bf16.gmra.mxu0 %v484
        %v844 = vpop.f32.mrf.mxu0
        %v845 = vadd.f32 %v523, %v844
        %v846 = vpop.f32.mrf.mxu0
        %v847 = vadd.f32 %v523, %v846
        %848 = vmatmul.bf16.gmra.mxu0 %v485
        %v849 = vpop.f32.mrf.mxu0
        %v850 = vadd.f32 %v523, %v849
        %v851 = vpop.f32.mrf.mxu0
        %v852 = vadd.f32 %v523, %v851
        %853 = vmatmul.bf16.gmra.mxu0 %v486
        %v854 = vpop.f32.mrf.mxu0
        %v855 = vadd.f32 %v523, %v854
        %v856 = vpop.f32.mrf.mxu0
        %v857 = vadd.f32 %v523, %v856
        %858 = vmatmul.bf16.gmra.mxu0 %v487
        %v859 = vpop.f32.mrf.mxu0
        %v860 = vadd.f32 %v523, %v859
        %v861 = vpop.f32.mrf.mxu0
        %v862 = vadd.f32 %v523, %v861
        %863 = vmatmul.bf16.gmra.mxu0 %v488
        %v864 = vpop.f32.mrf.mxu0
        %v865 = vadd.f32 %v523, %v864
        %v866 = vpop.f32.mrf.mxu0
        %v867 = vadd.f32 %v523, %v866
        %868 = vmatmul.bf16.gmra.mxu0 %v489
        %v869 = vpop.f32.mrf.mxu0
        %v870 = vadd.f32 %v523, %v869
        %v871 = vpop.f32.mrf.mxu0
        %v872 = vadd.f32 %v523, %v871
        %873 = vmatmul.bf16.gmra.mxu0 %v490
        %v874 = vpop.f32.mrf.mxu0
        %v875 = vadd.f32 %v523, %v874
        %v876 = vpop.f32.mrf.mxu0
        %v877 = vadd.f32 %v523, %v876
        %878 = vmatmul.bf16.gmra.mxu0 %v491
        %v879 = vpop.f32.mrf.mxu0
        %v880 = vadd.f32 %v523, %v879
        %v881 = vpop.f32.mrf.mxu0
        %v882 = vadd.f32 %v523, %v881
        %883 = vmatmul.bf16.gmra.mxu0 %v492
        %v884 = vpop.f32.mrf.mxu0
        %v885 = vadd.f32 %v523, %v884
        %v886 = vpop.f32.mrf.mxu0
        %v887 = vadd.f32 %v523, %v886
        %888 = vmatmul.bf16.gmra.mxu0 %v493
        %v889 = vpop.f32.mrf.mxu0
        %v890 = vadd.f32 %v523, %v889
        %v891 = vpop.f32.mrf.mxu0
        %v892 = vadd.f32 %v523, %v891
        %893 = vmatmul.bf16.gmra.mxu0 %v494
        %v894 = vpop.f32.mrf.mxu0
        %v895 = vadd.f32 %v523, %v894
        %v896 = vpop.f32.mrf.mxu0
        %v897 = vadd.f32 %v523, %v896
        %898 = vmatmul.bf16.gmra.mxu0 %v495
        %v899 = vpop.f32.mrf.mxu0
        %v900 = vadd.f32 %v523, %v899
        %v901 = vpop.f32.mrf.mxu0
        %v902 = vadd.f32 %v523, %v901
        %903 = vmatmul.bf16.gmra.mxu0 %v496
        %v904 = vpop.f32.mrf.mxu0
        %v905 = vadd.f32 %v523, %v904
        %v906 = vpop.f32.mrf.mxu0
        %v907 = vadd.f32 %v523, %v906
        %908 = vmatmul.bf16.gmra.mxu0 %v497
        %v909 = vpop.f32.mrf.mxu0
        %v910 = vadd.f32 %v523, %v909
        %v911 = vpop.f32.mrf.mxu0
        %v912 = vadd.f32 %v523, %v911
        %913 = vmatmul.bf16.gmra.mxu0 %v498
        %v914 = vpop.f32.mrf.mxu0
        %v915 = vadd.f32 %v523, %v914
        %v916 = vpop.f32.mrf.mxu0
        %v917 = vadd.f32 %v523, %v916
        %918 = vmatmul.bf16.gmra.mxu0 %v499
        %v919 = vpop.f32.mrf.mxu0
        %v920 = vadd.f32 %v523, %v919
        %v921 = vpop.f32.mrf.mxu0
        %v922 = vadd.f32 %v523, %v921
        %923 = vmatmul.bf16.gmra.mxu0 %v500
        %v924 = vpop.f32.mrf.mxu0
        %v925 = vadd.f32 %v523, %v924
        %v926 = vpop.f32.mrf.mxu0
        %v927 = vadd.f32 %v523, %v926
        %928 = vmatmul.bf16.gmra.mxu0 %v501
        %v929 = vpop.f32.mrf.mxu0
        %v930 = vadd.f32 %v523, %v929
        %v931 = vpop.f32.mrf.mxu0
        %v932 = vadd.f32 %v523, %v931
        %933 = vmatmul.bf16.gmra.mxu0 %v502
        %v934 = vpop.f32.mrf.mxu0
        %v935 = vadd.f32 %v523, %v934
        %v936 = vpop.f32.mrf.mxu0
        %v937 = vadd.f32 %v523, %v936
        %938 = vmatmul.bf16.gmra.mxu0 %v503
        %v939 = vpop.f32.mrf.mxu0
        %v940 = vadd.f32 %v523, %v939
        %v941 = vpop.f32.mrf.mxu0
        %v942 = vadd.f32 %v523, %v941
        %943 = vdwg.mxu0
        %v944 = vmax.f32 %v616, 0.0
        %v945 = vmax.f32 %v785, 0.0
        %v946 = vmax.f32 %v618, 0.0
        %v947 = vmax.f32 %v787, 0.0
        %v948 = vmax.f32 %v621, 0.0
        %v949 = vmax.f32 %v790, 0.0
        %v950 = vmax.f32 %v623, 0.0
        %v951 = vmax.f32 %v792, 0.0
        %v952 = vmax.f32 %v626, 0.0
        %v953 = vmax.f32 %v795, 0.0
        %v954 = vmax.f32 %v628, 0.0
        %v955 = vmax.f32 %v797, 0.0
        %v956 = vmax.f32 %v631, 0.0
        %v957 = vmax.f32 %v800, 0.0
        %v958 = vmax.f32 %v633, 0.0
        %v959 = vmax.f32 %v802, 0.0
        %v960 = vmax.f32 %v636, 0.0
        %v961 = vmax.f32 %v805, 0.0
        %v962 = vmax.f32 %v638, 0.0
        %v963 = vmax.f32 %v807, 0.0
        %v964 = vmax.f32 %v641, 0.0
        %v965 = vmax.f32 %v810, 0.0
        %v966 = vmax.f32 %v643, 0.0
        %v967 = vmax.f32 %v812, 0.0
        %v968 = vmax.f32 %v646, 0.0
        %v969 = vmax.f32 %v815, 0.0
        %v970 = vmax.f32 %v648, 0.0
        %v971 = vmax.f32 %v817, 0.0
        %v972 = vmax.f32 %v651, 0.0
        %v973 = vmax.f32 %v820, 0.0
        %v974 = vmax.f32 %v653, 0.0
        %v975 = vmax.f32 %v822, 0.0
        %v976 = vmax.f32 %v656, 0.0
        %v977 = vmax.f32 %v825, 0.0
        %v978 = vmax.f32 %v658, 0.0
        %v979 = vmax.f32 %v827, 0.0
        %v980 = vmax.f32 %v661, 0.0
        %v981 = vmax.f32 %v830, 0.0
        %v982 = vmax.f32 %v663, 0.0
        %v983 = vmax.f32 %v832, 0.0
        %v984 = vmax.f32 %v666, 0.0
        %v985 = vmax.f32 %v835, 0.0
        %v986 = vmax.f32 %v668, 0.0
        %v987 = vmax.f32 %v837, 0.0
        %v988 = vmax.f32 %v671, 0.0
        %v989 = vmax.f32 %v840, 0.0
        %v990 = vmax.f32 %v673, 0.0
        %v991 = vmax.f32 %v842, 0.0
        %v992 = vmax.f32 %v676, 0.0
        %v993 = vmax.f32 %v845, 0.0
        %v994 = vmax.f32 %v678, 0.0
        %v995 = vmax.f32 %v847, 0.0
        %v996 = vmax.f32 %v681, 0.0
        %v997 = vmax.f32 %v850, 0.0
        %v998 = vmax.f32 %v683, 0.0
        %v999 = vmax.f32 %v852, 0.0
        %v1000 = vmax.f32 %v686, 0.0
        %v1001 = vmax.f32 %v855, 0.0
        %v1002 = vmax.f32 %v688, 0.0
        %v1003 = vmax.f32 %v857, 0.0
        %v1004 = vmax.f32 %v691, 0.0
        %v1005 = vmax.f32 %v860, 0.0
        %v1006 = vmax.f32 %v693, 0.0
        %v1007 = vmax.f32 %v862, 0.0
        %v1008 = vmax.f32 %v696, 0.0
        %v1009 = vmax.f32 %v865, 0.0
        %v1010 = vmax.f32 %v698, 0.0
        %v1011 = vmax.f32 %v867, 0.0
        %v1012 = vmax.f32 %v701, 0.0
        %v1013 = vmax.f32 %v870, 0.0
        %v1014 = vmax.f32 %v703, 0.0
        %v1015 = vmax.f32 %v872, 0.0
        %v1016 = vmax.f32 %v706, 0.0
        %v1017 = vmax.f32 %v875, 0.0
        %v1018 = vmax.f32 %v708, 0.0
        %v1019 = vmax.f32 %v877, 0.0
        %v1020 = vmax.f32 %v711, 0.0
        %v1021 = vmax.f32 %v880, 0.0
        %v1022 = vmax.f32 %v713, 0.0
        %v1023 = vmax.f32 %v882, 0.0
        %v1024 = vmax.f32 %v716, 0.0
        %v1025 = vmax.f32 %v885, 0.0
        %v1026 = vmax.f32 %v718, 0.0
        %v1027 = vmax.f32 %v887, 0.0
        %v1028 = vmax.f32 %v721, 0.0
        %v1029 = vmax.f32 %v890, 0.0
        %v1030 = vmax.f32 %v723, 0.0
        %v1031 = vmax.f32 %v892, 0.0
        %v1032 = vmax.f32 %v726, 0.0
        %v1033 = vmax.f32 %v895, 0.0
        %v1034 = vmax.f32 %v728, 0.0
        %v1035 = vmax.f32 %v897, 0.0
        %v1036 = vmax.f32 %v731, 0.0
        %v1037 = vmax.f32 %v900, 0.0
        %v1038 = vmax.f32 %v733, 0.0
        %v1039 = vmax.f32 %v902, 0.0
        %v1040 = vmax.f32 %v736, 0.0
        %v1041 = vmax.f32 %v905, 0.0
        %v1042 = vmax.f32 %v738, 0.0
        %v1043 = vmax.f32 %v907, 0.0
        %v1044 = vmax.f32 %v741, 0.0
        %v1045 = vmax.f32 %v910, 0.0
        %v1046 = vmax.f32 %v743, 0.0
        %v1047 = vmax.f32 %v912, 0.0
        %v1048 = vmax.f32 %v746, 0.0
        %v1049 = vmax.f32 %v915, 0.0
        %v1050 = vmax.f32 %v748, 0.0
        %v1051 = vmax.f32 %v917, 0.0
        %v1052 = vmax.f32 %v751, 0.0
        %v1053 = vmax.f32 %v920, 0.0
        %v1054 = vmax.f32 %v753, 0.0
        %v1055 = vmax.f32 %v922, 0.0
        %v1056 = vmax.f32 %v756, 0.0
        %v1057 = vmax.f32 %v925, 0.0
        %v1058 = vmax.f32 %v758, 0.0
        %v1059 = vmax.f32 %v927, 0.0
        %v1060 = vmax.f32 %v761, 0.0
        %v1061 = vmax.f32 %v930, 0.0
        %v1062 = vmax.f32 %v763, 0.0
        %v1063 = vmax.f32 %v932, 0.0
        %v1064 = vmax.f32 %v766, 0.0
        %v1065 = vmax.f32 %v935, 0.0
        %v1066 = vmax.f32 %v768, 0.0
        %v1067 = vmax.f32 %v937, 0.0
        %v1068 = vmax.f32 %v771, 0.0
        %v1069 = vmax.f32 %v940, 0.0
        %v1070 = vmax.f32 %v773, 0.0
        %v1071 = vmax.f32 %v942, 0.0
        %v1072 = vpack.c.bf16 %v946, %v944
        %v1073 = vpack.c.bf16 %v947, %v945
        %v1074 = vpack.c.bf16 %v950, %v948
        %v1075 = vpack.c.bf16 %v951, %v949
        %v1076 = vpack.c.bf16 %v954, %v952
        %v1077 = vpack.c.bf16 %v955, %v953
        %v1078 = vpack.c.bf16 %v958, %v956
        %v1079 = vpack.c.bf16 %v959, %v957
        %v1080 = vpack.c.bf16 %v962, %v960
        %v1081 = vpack.c.bf16 %v963, %v961
        %v1082 = vpack.c.bf16 %v966, %v964
        %v1083 = vpack.c.bf16 %v967, %v965
        %v1084 = vpack.c.bf16 %v970, %v968
        %v1085 = vpack.c.bf16 %v971, %v969
        %v1086 = vpack.c.bf16 %v974, %v972
        %v1087 = vpack.c.bf16 %v975, %v973
        %v1088 = vpack.c.bf16 %v978, %v976
        %v1089 = vpack.c.bf16 %v979, %v977
        %v1090 = vpack.c.bf16 %v982, %v980
        %v1091 = vpack.c.bf16 %v983, %v981
        %v1092 = vpack.c.bf16 %v986, %v984
        %v1093 = vpack.c.bf16 %v987, %v985
        %v1094 = vpack.c.bf16 %v990, %v988
        %v1095 = vpack.c.bf16 %v991, %v989
        %v1096 = vpack.c.bf16 %v994, %v992
        %v1097 = vpack.c.bf16 %v995, %v993
        %v1098 = vpack.c.bf16 %v998, %v996
        %v1099 = vpack.c.bf16 %v999, %v997
        %v1100 = vpack.c.bf16 %v1002, %v1000
        %v1101 = vpack.c.bf16 %v1003, %v1001
        %v1102 = vpack.c.bf16 %v1006, %v1004
        %v1103 = vpack.c.bf16 %v1007, %v1005
        %v1104 = vpack.c.bf16 %v1010, %v1008
        %v1105 = vpack.c.bf16 %v1011, %v1009
        %v1106 = vpack.c.bf16 %v1014, %v1012
        %v1107 = vpack.c.bf16 %v1015, %v1013
        %v1108 = vpack.c.bf16 %v1018, %v1016
        %v1109 = vpack.c.bf16 %v1019, %v1017
        %v1110 = vpack.c.bf16 %v1022, %v1020
        %v1111 = vpack.c.bf16 %v1023, %v1021
        %v1112 = vpack.c.bf16 %v1026, %v1024
        %v1113 = vpack.c.bf16 %v1027, %v1025
        %v1114 = vpack.c.bf16 %v1030, %v1028
        %v1115 = vpack.c.bf16 %v1031, %v1029
        %v1116 = vpack.c.bf16 %v1034, %v1032
        %v1117 = vpack.c.bf16 %v1035, %v1033
        %v1118 = vpack.c.bf16 %v1038, %v1036
        %v1119 = vpack.c.bf16 %v1039, %v1037
        %v1120 = vpack.c.bf16 %v1042, %v1040
        %v1121 = vpack.c.bf16 %v1043, %v1041
        %v1122 = vpack.c.bf16 %v1046, %v1044
        %v1123 = vpack.c.bf16 %v1047, %v1045
        %v1124 = vpack.c.bf16 %v1050, %v1048
        %v1125 = vpack.c.bf16 %v1051, %v1049
        %v1126 = vpack.c.bf16 %v1054, %v1052
        %v1127 = vpack.c.bf16 %v1055, %v1053
        %v1128 = vpack.c.bf16 %v1058, %v1056
        %v1129 = vpack.c.bf16 %v1059, %v1057
        %v1130 = vpack.c.bf16 %v1062, %v1060
        %v1131 = vpack.c.bf16 %v1063, %v1061
        %v1132 = vpack.c.bf16 %v1066, %v1064
        %v1133 = vpack.c.bf16 %v1067, %v1065
        %v1134 = vpack.c.bf16 %v1070, %v1068
        %v1135 = vpack.c.bf16 %v1071, %v1069
        %v1136 = vld [vmem:[#allocation7] sm:$0xf]
        %v1137 = vld [vmem:[#allocation7 + $0x4] sm:$0xf]
        %v1138 = vld [vmem:[#allocation7 + $0x8] sm:$0xf]
        %v1139 = vld [vmem:[#allocation7 + $0xc] sm:$0xf]
        %v1140 = vld [vmem:[#allocation7 + $0x10] sm:$0xf]
        %v1141 = vld [vmem:[#allocation7 + $0x14] sm:$0xf]
        %v1142 = vld [vmem:[#allocation7 + $0x18] sm:$0xf]
        %v1143 = vld [vmem:[#allocation7 + $0x1c] sm:$0xf]
        %v1144 = vld [vmem:[#allocation7 + $0x20] sm:$0xf]
        %v1145 = vld [vmem:[#allocation7 + $0x24] sm:$0xf]
        %v1146 = vld [vmem:[#allocation7 + $0x28] sm:$0xf]
        %v1147 = vld [vmem:[#allocation7 + $0x2c] sm:$0xf]
        %v1148 = vld [vmem:[#allocation7 + $0x30] sm:$0xf]
        %v1149 = vld [vmem:[#allocation7 + $0x34] sm:$0xf]
        %v1150 = vld [vmem:[#allocation7 + $0x38] sm:$0xf]
        %v1151 = vld [vmem:[#allocation7 + $0x3c] sm:$0xf]
        %v1152 = vld [vmem:[#allocation7 + $0x40] sm:$0xf]
        %v1153 = vld [vmem:[#allocation7 + $0x44] sm:$0xf]
        %v1154 = vld [vmem:[#allocation7 + $0x48] sm:$0xf]
        %v1155 = vld [vmem:[#allocation7 + $0x4c] sm:$0xf]
        %v1156 = vld [vmem:[#allocation7 + $0x50] sm:$0xf]
        %v1157 = vld [vmem:[#allocation7 + $0x54] sm:$0xf]
        %v1158 = vld [vmem:[#allocation7 + $0x58] sm:$0xf]
        %v1159 = vld [vmem:[#allocation7 + $0x5c] sm:$0xf]
        %v1160 = vld [vmem:[#allocation7 + $0x60] sm:$0xf]
        %v1161 = vld [vmem:[#allocation7 + $0x64] sm:$0xf]
        %v1162 = vld [vmem:[#allocation7 + $0x68] sm:$0xf]
        %v1163 = vld [vmem:[#allocation7 + $0x6c] sm:$0xf]
        %v1164 = vld [vmem:[#allocation7 + $0x70] sm:$0xf]
        %v1165 = vld [vmem:[#allocation7 + $0x74] sm:$0xf]
        %v1166 = vld [vmem:[#allocation7 + $0x78] sm:$0xf]
        %v1167 = vld [vmem:[#allocation7 + $0x7c] sm:$0xf]
        %v1168 = vld [vmem:[%s4] sm:$0x1]
        %v1170 = vperm.slane %v1168, 0
        %v1204 = vunpack.c.l.b16 %v1136
        %v1205 = vunpack.c.l.b16 %v1137
        %v1206 = vunpack.c.l.b16 %v1138
        %v1207 = vunpack.c.l.b16 %v1139
        %v1208 = vunpack.c.l.b16 %v1140
        %v1209 = vunpack.c.l.b16 %v1141
        %v1210 = vunpack.c.l.b16 %v1142
        %v1211 = vunpack.c.l.b16 %v1143
        %v1212 = vunpack.c.l.b16 %v1144
        %v1213 = vunpack.c.l.b16 %v1145
        %v1214 = vunpack.c.l.b16 %v1146
        %v1215 = vunpack.c.l.b16 %v1147
        %v1216 = vunpack.c.l.b16 %v1148
        %v1217 = vunpack.c.l.b16 %v1149
        %v1218 = vunpack.c.l.b16 %v1150
        %v1219 = vunpack.c.l.b16 %v1151
        %v1220 = vunpack.c.l.b16 %v1152
        %v1221 = vunpack.c.l.b16 %v1153
        %v1222 = vunpack.c.l.b16 %v1154
        %v1223 = vunpack.c.l.b16 %v1155
        %v1224 = vunpack.c.l.b16 %v1156
        %v1225 = vunpack.c.l.b16 %v1157
        %v1226 = vunpack.c.l.b16 %v1158
        %v1227 = vunpack.c.l.b16 %v1159
        %v1228 = vunpack.c.l.b16 %v1160
        %v1229 = vunpack.c.l.b16 %v1161
        %v1230 = vunpack.c.l.b16 %v1162
        %v1231 = vunpack.c.l.b16 %v1163
        %v1232 = vunpack.c.l.b16 %v1164
        %v1233 = vunpack.c.l.b16 %v1165
        %v1234 = vunpack.c.l.b16 %v1166
        %v1235 = vunpack.c.l.b16 %v1167
        %v1236 = vpack.c.b16 %v1205, %v1204
        %v1237 = vpack.c.b16 %v1207, %v1206
        %v1238 = vpack.c.b16 %v1209, %v1208
        %v1239 = vpack.c.b16 %v1211, %v1210
        %v1240 = vpack.c.b16 %v1213, %v1212
        %v1241 = vpack.c.b16 %v1215, %v1214
        %v1242 = vpack.c.b16 %v1217, %v1216
        %v1243 = vpack.c.b16 %v1219, %v1218
        %v1244 = vpack.c.b16 %v1221, %v1220
        %v1245 = vpack.c.b16 %v1223, %v1222
        %v1246 = vpack.c.b16 %v1225, %v1224
        %v1247 = vpack.c.b16 %v1227, %v1226
        %v1248 = vpack.c.b16 %v1229, %v1228
        %v1249 = vpack.c.b16 %v1231, %v1230
        %v1250 = vpack.c.b16 %v1233, %v1232
        %v1251 = vpack.c.b16 %v1235, %v1234
        %1268 = vmatpush.bf16.msra.mxu0 %v1243
        %1269 = vmatpush.bf16.msra.mxu0 %v1242
        %1270 = vmatpush.bf16.msra.mxu0 %v1241
        %1271 = vmatpush.bf16.msra.mxu0 %v1240
        %1272 = vmatpush.bf16.msra.mxu0 %v1239
        %1273 = vmatpush.bf16.msra.mxu0 %v1238
        %1274 = vmatpush.bf16.msra.mxu0 %v1237
        %1275 = vmatpush.bf16.msra.mxu0 %v1236
        %1276 = vmatmul.bf16.gmra.mxu0 %v1072
        %v1277 = vpop.f32.mrf.mxu0
        %v1278 = vadd.f32 %v1170, %v1277
        %v1279 = vpop.f32.mrf.mxu0
        %v1280 = vadd.f32 %v1170, %v1279
        %1281 = vmatmul.bf16.gmra.mxu0 %v1074
        %v1282 = vpop.f32.mrf.mxu0
        %v1283 = vadd.f32 %v1170, %v1282
        %v1284 = vpop.f32.mrf.mxu0
        %v1285 = vadd.f32 %v1170, %v1284
        %1286 = vmatmul.bf16.gmra.mxu0 %v1076
        %v1287 = vpop.f32.mrf.mxu0
        %v1288 = vadd.f32 %v1170, %v1287
        %v1289 = vpop.f32.mrf.mxu0
        %v1290 = vadd.f32 %v1170, %v1289
        %1291 = vmatmul.bf16.gmra.mxu0 %v1078
        %v1292 = vpop.f32.mrf.mxu0
        %v1293 = vadd.f32 %v1170, %v1292
        %v1294 = vpop.f32.mrf.mxu0
        %v1295 = vadd.f32 %v1170, %v1294
        %1296 = vmatmul.bf16.gmra.mxu0 %v1080
        %v1297 = vpop.f32.mrf.mxu0
        %v1298 = vadd.f32 %v1170, %v1297
        %v1299 = vpop.f32.mrf.mxu0
        %v1300 = vadd.f32 %v1170, %v1299
        %1301 = vmatmul.bf16.gmra.mxu0 %v1082
        %v1302 = vpop.f32.mrf.mxu0
        %v1303 = vadd.f32 %v1170, %v1302
        %v1304 = vpop.f32.mrf.mxu0
        %v1305 = vadd.f32 %v1170, %v1304
        %1306 = vmatmul.bf16.gmra.mxu0 %v1084
        %v1307 = vpop.f32.mrf.mxu0
        %v1308 = vadd.f32 %v1170, %v1307
        %v1309 = vpop.f32.mrf.mxu0
        %v1310 = vadd.f32 %v1170, %v1309
        %1311 = vmatmul.bf16.gmra.mxu0 %v1086
        %v1312 = vpop.f32.mrf.mxu0
        %v1313 = vadd.f32 %v1170, %v1312
        %v1314 = vpop.f32.mrf.mxu0
        %v1315 = vadd.f32 %v1170, %v1314
        %1316 = vmatmul.bf16.gmra.mxu0 %v1088
        %v1317 = vpop.f32.mrf.mxu0
        %v1318 = vadd.f32 %v1170, %v1317
        %v1319 = vpop.f32.mrf.mxu0
        %v1320 = vadd.f32 %v1170, %v1319
        %1321 = vmatmul.bf16.gmra.mxu0 %v1090
        %v1322 = vpop.f32.mrf.mxu0
        %v1323 = vadd.f32 %v1170, %v1322
        %v1324 = vpop.f32.mrf.mxu0
        %v1325 = vadd.f32 %v1170, %v1324
        %1326 = vmatmul.bf16.gmra.mxu0 %v1092
        %v1327 = vpop.f32.mrf.mxu0
        %v1328 = vadd.f32 %v1170, %v1327
        %v1329 = vpop.f32.mrf.mxu0
        %v1330 = vadd.f32 %v1170, %v1329
        %1331 = vmatmul.bf16.gmra.mxu0 %v1094
        %v1332 = vpop.f32.mrf.mxu0
        %v1333 = vadd.f32 %v1170, %v1332
        %v1334 = vpop.f32.mrf.mxu0
        %v1335 = vadd.f32 %v1170, %v1334
        %1336 = vmatmul.bf16.gmra.mxu0 %v1096
        %v1337 = vpop.f32.mrf.mxu0
        %v1338 = vadd.f32 %v1170, %v1337
        %v1339 = vpop.f32.mrf.mxu0
        %v1340 = vadd.f32 %v1170, %v1339
        %1341 = vmatmul.bf16.gmra.mxu0 %v1098
        %v1342 = vpop.f32.mrf.mxu0
        %v1343 = vadd.f32 %v1170, %v1342
        %v1344 = vpop.f32.mrf.mxu0
        %v1345 = vadd.f32 %v1170, %v1344
        %1346 = vmatmul.bf16.gmra.mxu0 %v1100
        %v1347 = vpop.f32.mrf.mxu0
        %v1348 = vadd.f32 %v1170, %v1347
        %v1349 = vpop.f32.mrf.mxu0
        %v1350 = vadd.f32 %v1170, %v1349
        %1351 = vmatmul.bf16.gmra.mxu0 %v1102
        %v1352 = vpop.f32.mrf.mxu0
        %v1353 = vadd.f32 %v1170, %v1352
        %v1354 = vpop.f32.mrf.mxu0
        %v1355 = vadd.f32 %v1170, %v1354
        %1356 = vmatmul.bf16.gmra.mxu0 %v1104
        %v1357 = vpop.f32.mrf.mxu0
        %v1358 = vadd.f32 %v1170, %v1357
        %v1359 = vpop.f32.mrf.mxu0
        %v1360 = vadd.f32 %v1170, %v1359
        %1361 = vmatmul.bf16.gmra.mxu0 %v1106
        %v1362 = vpop.f32.mrf.mxu0
        %v1363 = vadd.f32 %v1170, %v1362
        %v1364 = vpop.f32.mrf.mxu0
        %v1365 = vadd.f32 %v1170, %v1364
        %1366 = vmatmul.bf16.gmra.mxu0 %v1108
        %v1367 = vpop.f32.mrf.mxu0
        %v1368 = vadd.f32 %v1170, %v1367
        %v1369 = vpop.f32.mrf.mxu0
        %v1370 = vadd.f32 %v1170, %v1369
        %1371 = vmatmul.bf16.gmra.mxu0 %v1110
        %v1372 = vpop.f32.mrf.mxu0
        %v1373 = vadd.f32 %v1170, %v1372
        %v1374 = vpop.f32.mrf.mxu0
        %v1375 = vadd.f32 %v1170, %v1374
        %1376 = vmatmul.bf16.gmra.mxu0 %v1112
        %v1377 = vpop.f32.mrf.mxu0
        %v1378 = vadd.f32 %v1170, %v1377
        %v1379 = vpop.f32.mrf.mxu0
        %v1380 = vadd.f32 %v1170, %v1379
        %1381 = vmatmul.bf16.gmra.mxu0 %v1114
        %v1382 = vpop.f32.mrf.mxu0
        %v1383 = vadd.f32 %v1170, %v1382
        %v1384 = vpop.f32.mrf.mxu0
        %v1385 = vadd.f32 %v1170, %v1384
        %1386 = vmatmul.bf16.gmra.mxu0 %v1116
        %v1387 = vpop.f32.mrf.mxu0
        %v1388 = vadd.f32 %v1170, %v1387
        %v1389 = vpop.f32.mrf.mxu0
        %v1390 = vadd.f32 %v1170, %v1389
        %1391 = vmatmul.bf16.gmra.mxu0 %v1118
        %v1392 = vpop.f32.mrf.mxu0
        %v1393 = vadd.f32 %v1170, %v1392
        %v1394 = vpop.f32.mrf.mxu0
        %v1395 = vadd.f32 %v1170, %v1394
        %1396 = vmatmul.bf16.gmra.mxu0 %v1120
        %v1397 = vpop.f32.mrf.mxu0
        %v1398 = vadd.f32 %v1170, %v1397
        %v1399 = vpop.f32.mrf.mxu0
        %v1400 = vadd.f32 %v1170, %v1399
        %1401 = vmatmul.bf16.gmra.mxu0 %v1122
        %v1402 = vpop.f32.mrf.mxu0
        %v1403 = vadd.f32 %v1170, %v1402
        %v1404 = vpop.f32.mrf.mxu0
        %v1405 = vadd.f32 %v1170, %v1404
        %1406 = vmatmul.bf16.gmra.mxu0 %v1124
        %v1407 = vpop.f32.mrf.mxu0
        %v1408 = vadd.f32 %v1170, %v1407
        %v1409 = vpop.f32.mrf.mxu0
        %v1410 = vadd.f32 %v1170, %v1409
        %1411 = vmatmul.bf16.gmra.mxu0 %v1126
        %v1412 = vpop.f32.mrf.mxu0
        %v1413 = vadd.f32 %v1170, %v1412
        %v1414 = vpop.f32.mrf.mxu0
        %v1415 = vadd.f32 %v1170, %v1414
        %1416 = vmatmul.bf16.gmra.mxu0 %v1128
        %v1417 = vpop.f32.mrf.mxu0
        %v1418 = vadd.f32 %v1170, %v1417
        %v1419 = vpop.f32.mrf.mxu0
        %v1420 = vadd.f32 %v1170, %v1419
        %1421 = vmatmul.bf16.gmra.mxu0 %v1130
        %v1422 = vpop.f32.mrf.mxu0
        %v1423 = vadd.f32 %v1170, %v1422
        %v1424 = vpop.f32.mrf.mxu0
        %v1425 = vadd.f32 %v1170, %v1424
        %1426 = vmatmul.bf16.gmra.mxu0 %v1132
        %v1427 = vpop.f32.mrf.mxu0
        %v1428 = vadd.f32 %v1170, %v1427
        %v1429 = vpop.f32.mrf.mxu0
        %v1430 = vadd.f32 %v1170, %v1429
        %1431 = vmatmul.bf16.gmra.mxu0 %v1134
        %v1432 = vpop.f32.mrf.mxu0
        %v1433 = vadd.f32 %v1170, %v1432
        %v1434 = vpop.f32.mrf.mxu0
        %v1435 = vadd.f32 %v1170, %v1434
        %1436 = vdwg.mxu0
        %1437 = vmatpush.bf16.msra.mxu0 %v1251
        %1438 = vmatpush.bf16.msra.mxu0 %v1250
        %1439 = vmatpush.bf16.msra.mxu0 %v1249
        %1440 = vmatpush.bf16.msra.mxu0 %v1248
        %1441 = vmatpush.bf16.msra.mxu0 %v1247
        %1442 = vmatpush.bf16.msra.mxu0 %v1246
        %1443 = vmatpush.bf16.msra.mxu0 %v1245
        %1444 = vmatpush.bf16.msra.mxu0 %v1244
        %1445 = vmatmul.bf16.gmra.mxu0 %v1073
        %v1446 = vpop.f32.mrf.mxu0
        %v1447 = vadd.f32 %v1278, %v1446
        %v1448 = vpop.f32.mrf.mxu0
        %v1449 = vadd.f32 %v1280, %v1448
        %1450 = vmatmul.bf16.gmra.mxu0 %v1075
        %v1451 = vpop.f32.mrf.mxu0
        %v1452 = vadd.f32 %v1283, %v1451
        %v1453 = vpop.f32.mrf.mxu0
        %v1454 = vadd.f32 %v1285, %v1453
        %1455 = vmatmul.bf16.gmra.mxu0 %v1077
        %v1456 = vpop.f32.mrf.mxu0
        %v1457 = vadd.f32 %v1288, %v1456
        %v1458 = vpop.f32.mrf.mxu0
        %v1459 = vadd.f32 %v1290, %v1458
        %1460 = vmatmul.bf16.gmra.mxu0 %v1079
        %v1461 = vpop.f32.mrf.mxu0
        %v1462 = vadd.f32 %v1293, %v1461
        %v1463 = vpop.f32.mrf.mxu0
        %v1464 = vadd.f32 %v1295, %v1463
        %1465 = vmatmul.bf16.gmra.mxu0 %v1081
        %v1466 = vpop.f32.mrf.mxu0
        %v1467 = vadd.f32 %v1298, %v1466
        %v1468 = vpop.f32.mrf.mxu0
        %v1469 = vadd.f32 %v1300, %v1468
        %1470 = vmatmul.bf16.gmra.mxu0 %v1083
        %v1471 = vpop.f32.mrf.mxu0
        %v1472 = vadd.f32 %v1303, %v1471
        %v1473 = vpop.f32.mrf.mxu0
        %v1474 = vadd.f32 %v1305, %v1473
        %1475 = vmatmul.bf16.gmra.mxu0 %v1085
        %v1476 = vpop.f32.mrf.mxu0
        %v1477 = vadd.f32 %v1308, %v1476
        %v1478 = vpop.f32.mrf.mxu0
        %v1479 = vadd.f32 %v1310, %v1478
        %1480 = vmatmul.bf16.gmra.mxu0 %v1087
        %v1481 = vpop.f32.mrf.mxu0
        %v1482 = vadd.f32 %v1313, %v1481
        %v1483 = vpop.f32.mrf.mxu0
        %v1484 = vadd.f32 %v1315, %v1483
        %1485 = vmatmul.bf16.gmra.mxu0 %v1089
        %v1486 = vpop.f32.mrf.mxu0
        %v1487 = vadd.f32 %v1318, %v1486
        %v1488 = vpop.f32.mrf.mxu0
        %v1489 = vadd.f32 %v1320, %v1488
        %1490 = vmatmul.bf16.gmra.mxu0 %v1091
        %v1491 = vpop.f32.mrf.mxu0
        %v1492 = vadd.f32 %v1323, %v1491
        %v1493 = vpop.f32.mrf.mxu0
        %v1494 = vadd.f32 %v1325, %v1493
        %1495 = vmatmul.bf16.gmra.mxu0 %v1093
        %v1496 = vpop.f32.mrf.mxu0
        %v1497 = vadd.f32 %v1328, %v1496
        %v1498 = vpop.f32.mrf.mxu0
        %v1499 = vadd.f32 %v1330, %v1498
        %1500 = vmatmul.bf16.gmra.mxu0 %v1095
        %v1501 = vpop.f32.mrf.mxu0
        %v1502 = vadd.f32 %v1333, %v1501
        %v1503 = vpop.f32.mrf.mxu0
        %v1504 = vadd.f32 %v1335, %v1503
        %1505 = vmatmul.bf16.gmra.mxu0 %v1097
        %v1506 = vpop.f32.mrf.mxu0
        %v1507 = vadd.f32 %v1338, %v1506
        %v1508 = vpop.f32.mrf.mxu0
        %v1509 = vadd.f32 %v1340, %v1508
        %1510 = vmatmul.bf16.gmra.mxu0 %v1099
        %v1511 = vpop.f32.mrf.mxu0
        %v1512 = vadd.f32 %v1343, %v1511
        %v1513 = vpop.f32.mrf.mxu0
        %v1514 = vadd.f32 %v1345, %v1513
        %1515 = vmatmul.bf16.gmra.mxu0 %v1101
        %v1516 = vpop.f32.mrf.mxu0
        %v1517 = vadd.f32 %v1348, %v1516
        %v1518 = vpop.f32.mrf.mxu0
        %v1519 = vadd.f32 %v1350, %v1518
        %1520 = vmatmul.bf16.gmra.mxu0 %v1103
        %v1521 = vpop.f32.mrf.mxu0
        %v1522 = vadd.f32 %v1353, %v1521
        %v1523 = vpop.f32.mrf.mxu0
        %v1524 = vadd.f32 %v1355, %v1523
        %1525 = vmatmul.bf16.gmra.mxu0 %v1105
        %v1526 = vpop.f32.mrf.mxu0
        %v1527 = vadd.f32 %v1358, %v1526
        %v1528 = vpop.f32.mrf.mxu0
        %v1529 = vadd.f32 %v1360, %v1528
        %1530 = vmatmul.bf16.gmra.mxu0 %v1107
        %v1531 = vpop.f32.mrf.mxu0
        %v1532 = vadd.f32 %v1363, %v1531
        %v1533 = vpop.f32.mrf.mxu0
        %v1534 = vadd.f32 %v1365, %v1533
        %1535 = vmatmul.bf16.gmra.mxu0 %v1109
        %v1536 = vpop.f32.mrf.mxu0
        %v1537 = vadd.f32 %v1368, %v1536
        %v1538 = vpop.f32.mrf.mxu0
        %v1539 = vadd.f32 %v1370, %v1538
        %1540 = vmatmul.bf16.gmra.mxu0 %v1111
        %v1541 = vpop.f32.mrf.mxu0
        %v1542 = vadd.f32 %v1373, %v1541
        %v1543 = vpop.f32.mrf.mxu0
        %v1544 = vadd.f32 %v1375, %v1543
        %1545 = vmatmul.bf16.gmra.mxu0 %v1113
        %v1546 = vpop.f32.mrf.mxu0
        %v1547 = vadd.f32 %v1378, %v1546
        %v1548 = vpop.f32.mrf.mxu0
        %v1549 = vadd.f32 %v1380, %v1548
        %1550 = vmatmul.bf16.gmra.mxu0 %v1115
        %v1551 = vpop.f32.mrf.mxu0
        %v1552 = vadd.f32 %v1383, %v1551
        %v1553 = vpop.f32.mrf.mxu0
        %v1554 = vadd.f32 %v1385, %v1553
        %1555 = vmatmul.bf16.gmra.mxu0 %v1117
        %v1556 = vpop.f32.mrf.mxu0
        %v1557 = vadd.f32 %v1388, %v1556
        %v1558 = vpop.f32.mrf.mxu0
        %v1559 = vadd.f32 %v1390, %v1558
        %1560 = vmatmul.bf16.gmra.mxu0 %v1119
        %v1561 = vpop.f32.mrf.mxu0
        %v1562 = vadd.f32 %v1393, %v1561
        %v1563 = vpop.f32.mrf.mxu0
        %v1564 = vadd.f32 %v1395, %v1563
        %1565 = vmatmul.bf16.gmra.mxu0 %v1121
        %v1566 = vpop.f32.mrf.mxu0
        %v1567 = vadd.f32 %v1398, %v1566
        %v1568 = vpop.f32.mrf.mxu0
        %v1569 = vadd.f32 %v1400, %v1568
        %1570 = vmatmul.bf16.gmra.mxu0 %v1123
        %v1571 = vpop.f32.mrf.mxu0
        %v1572 = vadd.f32 %v1403, %v1571
        %v1573 = vpop.f32.mrf.mxu0
        %v1574 = vadd.f32 %v1405, %v1573
        %1575 = vmatmul.bf16.gmra.mxu0 %v1125
        %v1576 = vpop.f32.mrf.mxu0
        %v1577 = vadd.f32 %v1408, %v1576
        %v1578 = vpop.f32.mrf.mxu0
        %v1579 = vadd.f32 %v1410, %v1578
        %1580 = vmatmul.bf16.gmra.mxu0 %v1127
        %v1581 = vpop.f32.mrf.mxu0
        %v1582 = vadd.f32 %v1413, %v1581
        %v1583 = vpop.f32.mrf.mxu0
        %v1584 = vadd.f32 %v1415, %v1583
        %1585 = vmatmul.bf16.gmra.mxu0 %v1129
        %v1586 = vpop.f32.mrf.mxu0
        %v1587 = vadd.f32 %v1418, %v1586
        %v1588 = vpop.f32.mrf.mxu0
        %v1589 = vadd.f32 %v1420, %v1588
        %1590 = vmatmul.bf16.gmra.mxu0 %v1131
        %v1591 = vpop.f32.mrf.mxu0
        %v1592 = vadd.f32 %v1423, %v1591
        %v1593 = vpop.f32.mrf.mxu0
        %v1594 = vadd.f32 %v1425, %v1593
        %1595 = vmatmul.bf16.gmra.mxu0 %v1133
        %v1596 = vpop.f32.mrf.mxu0
        %v1597 = vadd.f32 %v1428, %v1596
        %v1598 = vpop.f32.mrf.mxu0
        %v1599 = vadd.f32 %v1430, %v1598
        %1600 = vmatmul.bf16.gmra.mxu0 %v1135
        %v1601 = vpop.f32.mrf.mxu0
        %v1602 = vadd.f32 %v1433, %v1601
        %v1603 = vpop.f32.mrf.mxu0
        %v1604 = vadd.f32 %v1435, %v1603
        %1605 = vdwg.mxu0
        %v1606 = vmax.f32 %v1447, 0.0
        %v1607 = vmax.f32 %v1449, 0.0
        %v1608 = vmax.f32 %v1452, 0.0
        %v1609 = vmax.f32 %v1454, 0.0
        %v1610 = vmax.f32 %v1457, 0.0
        %v1611 = vmax.f32 %v1459, 0.0
        %v1612 = vmax.f32 %v1462, 0.0
        %v1613 = vmax.f32 %v1464, 0.0
        %v1614 = vmax.f32 %v1467, 0.0
        %v1615 = vmax.f32 %v1469, 0.0
        %v1616 = vmax.f32 %v1472, 0.0
        %v1617 = vmax.f32 %v1474, 0.0
        %v1618 = vmax.f32 %v1477, 0.0
        %v1619 = vmax.f32 %v1479, 0.0
        %v1620 = vmax.f32 %v1482, 0.0
        %v1621 = vmax.f32 %v1484, 0.0
        %v1622 = vmax.f32 %v1487, 0.0
        %v1623 = vmax.f32 %v1489, 0.0
        %v1624 = vmax.f32 %v1492, 0.0
        %v1625 = vmax.f32 %v1494, 0.0
        %v1626 = vmax.f32 %v1497, 0.0
        %v1627 = vmax.f32 %v1499, 0.0
        %v1628 = vmax.f32 %v1502, 0.0
        %v1629 = vmax.f32 %v1504, 0.0
        %v1630 = vmax.f32 %v1507, 0.0
        %v1631 = vmax.f32 %v1509, 0.0
        %v1632 = vmax.f32 %v1512, 0.0
        %v1633 = vmax.f32 %v1514, 0.0
        %v1634 = vmax.f32 %v1517, 0.0
        %v1635 = vmax.f32 %v1519, 0.0
        %v1636 = vmax.f32 %v1522, 0.0
        %v1637 = vmax.f32 %v1524, 0.0
        %v1638 = vmax.f32 %v1527, 0.0
        %v1639 = vmax.f32 %v1529, 0.0
        %v1640 = vmax.f32 %v1532, 0.0
        %v1641 = vmax.f32 %v1534, 0.0
        %v1642 = vmax.f32 %v1537, 0.0
        %v1643 = vmax.f32 %v1539, 0.0
        %v1644 = vmax.f32 %v1542, 0.0
        %v1645 = vmax.f32 %v1544, 0.0
        %v1646 = vmax.f32 %v1547, 0.0
        %v1647 = vmax.f32 %v1549, 0.0
        %v1648 = vmax.f32 %v1552, 0.0
        %v1649 = vmax.f32 %v1554, 0.0
        %v1650 = vmax.f32 %v1557, 0.0
        %v1651 = vmax.f32 %v1559, 0.0
        %v1652 = vmax.f32 %v1562, 0.0
        %v1653 = vmax.f32 %v1564, 0.0
        %v1654 = vmax.f32 %v1567, 0.0
        %v1655 = vmax.f32 %v1569, 0.0
        %v1656 = vmax.f32 %v1572, 0.0
        %v1657 = vmax.f32 %v1574, 0.0
        %v1658 = vmax.f32 %v1577, 0.0
        %v1659 = vmax.f32 %v1579, 0.0
        %v1660 = vmax.f32 %v1582, 0.0
        %v1661 = vmax.f32 %v1584, 0.0
        %v1662 = vmax.f32 %v1587, 0.0
        %v1663 = vmax.f32 %v1589, 0.0
        %v1664 = vmax.f32 %v1592, 0.0
        %v1665 = vmax.f32 %v1594, 0.0
        %v1666 = vmax.f32 %v1597, 0.0
        %v1667 = vmax.f32 %v1599, 0.0
        %v1668 = vmax.f32 %v1602, 0.0
        %v1669 = vmax.f32 %v1604, 0.0
        %v1670 = vpack.c.bf16 %v1607, %v1606
        %v1671 = vpack.c.bf16 %v1609, %v1608
        %v1672 = vpack.c.bf16 %v1611, %v1610
        %v1673 = vpack.c.bf16 %v1613, %v1612
        %v1674 = vpack.c.bf16 %v1615, %v1614
        %v1675 = vpack.c.bf16 %v1617, %v1616
        %v1676 = vpack.c.bf16 %v1619, %v1618
        %v1677 = vpack.c.bf16 %v1621, %v1620
        %v1678 = vpack.c.bf16 %v1623, %v1622
        %v1679 = vpack.c.bf16 %v1625, %v1624
        %v1680 = vpack.c.bf16 %v1627, %v1626
        %v1681 = vpack.c.bf16 %v1629, %v1628
        %v1682 = vpack.c.bf16 %v1631, %v1630
        %v1683 = vpack.c.bf16 %v1633, %v1632
        %v1684 = vpack.c.bf16 %v1635, %v1634
        %v1685 = vpack.c.bf16 %v1637, %v1636
        %v1686 = vpack.c.bf16 %v1639, %v1638
        %v1687 = vpack.c.bf16 %v1641, %v1640
        %v1688 = vpack.c.bf16 %v1643, %v1642
        %v1689 = vpack.c.bf16 %v1645, %v1644
        %v1690 = vpack.c.bf16 %v1647, %v1646
        %v1691 = vpack.c.bf16 %v1649, %v1648
        %v1692 = vpack.c.bf16 %v1651, %v1650
        %v1693 = vpack.c.bf16 %v1653, %v1652
        %v1694 = vpack.c.bf16 %v1655, %v1654
        %v1695 = vpack.c.bf16 %v1657, %v1656
        %v1696 = vpack.c.bf16 %v1659, %v1658
        %v1697 = vpack.c.bf16 %v1661, %v1660
        %v1698 = vpack.c.bf16 %v1663, %v1662
        %v1699 = vpack.c.bf16 %v1665, %v1664
        %v1700 = vpack.c.bf16 %v1667, %v1666
        %v1701 = vpack.c.bf16 %v1669, %v1668
        %v1702 = vld [vmem:[#allocation8] sm:$0xf]
        %v1703 = vld [vmem:[#allocation8 + $0x4] sm:$0xf]
        %v1704 = vld [vmem:[#allocation8 + $0x8] sm:$0xf]
        %v1705 = vld [vmem:[#allocation8 + $0xc] sm:$0xf]
        %v1706 = vld [vmem:[#allocation8 + $0x10] sm:$0xf]
        %v1707 = vld [vmem:[#allocation8 + $0x14] sm:$0xf]
        %v1708 = vld [vmem:[#allocation8 + $0x18] sm:$0xf]
        %v1709 = vld [vmem:[#allocation8 + $0x1c] sm:$0xf]
        %v1710 = vld [vmem:[#allocation8 + $0x20] sm:$0xf]
        %v1711 = vld [vmem:[#allocation8 + $0x24] sm:$0xf]
        %v1712 = vld [vmem:[#allocation8 + $0x28] sm:$0xf]
        %v1713 = vld [vmem:[#allocation8 + $0x2c] sm:$0xf]
        %v1714 = vld [vmem:[#allocation8 + $0x30] sm:$0xf]
        %v1715 = vld [vmem:[#allocation8 + $0x34] sm:$0xf]
        %v1716 = vld [vmem:[#allocation8 + $0x38] sm:$0xf]
        %v1717 = vld [vmem:[#allocation8 + $0x3c] sm:$0xf]
        %v1718 = vld [vmem:[%s6] sm:$0x1]
        %v1720 = vperm.slane %v1718, 0
        %v1738 = vunpack.c.l.b16 %v1702
        %v1739 = vunpack.c.l.b16 %v1703
        %v1740 = vunpack.c.l.b16 %v1704
        %v1741 = vunpack.c.l.b16 %v1705
        %v1742 = vunpack.c.l.b16 %v1706
        %v1743 = vunpack.c.l.b16 %v1707
        %v1744 = vunpack.c.l.b16 %v1708
        %v1745 = vunpack.c.l.b16 %v1709
        %v1746 = vunpack.c.l.b16 %v1710
        %v1747 = vunpack.c.l.b16 %v1711
        %v1748 = vunpack.c.l.b16 %v1712
        %v1749 = vunpack.c.l.b16 %v1713
        %v1750 = vunpack.c.l.b16 %v1714
        %v1751 = vunpack.c.l.b16 %v1715
        %v1752 = vunpack.c.l.b16 %v1716
        %v1753 = vunpack.c.l.b16 %v1717
        %v1754 = vpack.c.b16 %v1739, %v1738
        %v1755 = vpack.c.b16 %v1741, %v1740
        %v1756 = vpack.c.b16 %v1743, %v1742
        %v1757 = vpack.c.b16 %v1745, %v1744
        %v1758 = vpack.c.b16 %v1747, %v1746
        %v1759 = vpack.c.b16 %v1749, %v1748
        %v1760 = vpack.c.b16 %v1751, %v1750
        %v1761 = vpack.c.b16 %v1753, %v1752
        %1770 = vmatpush.bf16.msra.mxu0 %v1761
        %1771 = vmatpush.bf16.msra.mxu0 %v1760
        %1772 = vmatpush.bf16.msra.mxu0 %v1759
        %1773 = vmatpush.bf16.msra.mxu0 %v1758
        %1774 = vmatpush.bf16.msra.mxu0 %v1757
        %1775 = vmatpush.bf16.msra.mxu0 %v1756
        %1776 = vmatpush.bf16.msra.mxu0 %v1755
        %1777 = vmatpush.bf16.msra.mxu0 %v1754
        %1778 = vmatmul.bf16.gmra.mxu0 %v1670
        %v1779 = vpop.f32.mrf.mxu0
        %v1780 = vadd.f32 %v1720, %v1779
        %v1781 = vpop.f32.mrf.mxu0
        %v1782 = vadd.f32 %v1720, %v1781
        %1783 = vmatmul.bf16.gmra.mxu0 %v1671
        %v1784 = vpop.f32.mrf.mxu0
        %v1785 = vadd.f32 %v1720, %v1784
        %v1786 = vpop.f32.mrf.mxu0
        %v1787 = vadd.f32 %v1720, %v1786
        %1788 = vmatmul.bf16.gmra.mxu0 %v1672
        %v1789 = vpop.f32.mrf.mxu0
        %v1790 = vadd.f32 %v1720, %v1789
        %v1791 = vpop.f32.mrf.mxu0
        %v1792 = vadd.f32 %v1720, %v1791
        %1793 = vmatmul.bf16.gmra.mxu0 %v1673
        %v1794 = vpop.f32.mrf.mxu0
        %v1795 = vadd.f32 %v1720, %v1794
        %v1796 = vpop.f32.mrf.mxu0
        %v1797 = vadd.f32 %v1720, %v1796
        %1798 = vmatmul.bf16.gmra.mxu0 %v1674
        %v1799 = vpop.f32.mrf.mxu0
        %v1800 = vadd.f32 %v1720, %v1799
        %v1801 = vpop.f32.mrf.mxu0
        %v1802 = vadd.f32 %v1720, %v1801
        %1803 = vmatmul.bf16.gmra.mxu0 %v1675
        %v1804 = vpop.f32.mrf.mxu0
        %v1805 = vadd.f32 %v1720, %v1804
        %v1806 = vpop.f32.mrf.mxu0
        %v1807 = vadd.f32 %v1720, %v1806
        %1808 = vmatmul.bf16.gmra.mxu0 %v1676
        %v1809 = vpop.f32.mrf.mxu0
        %v1810 = vadd.f32 %v1720, %v1809
        %v1811 = vpop.f32.mrf.mxu0
        %v1812 = vadd.f32 %v1720, %v1811
        %1813 = vmatmul.bf16.gmra.mxu0 %v1677
        %v1814 = vpop.f32.mrf.mxu0
        %v1815 = vadd.f32 %v1720, %v1814
        %v1816 = vpop.f32.mrf.mxu0
        %v1817 = vadd.f32 %v1720, %v1816
        %1818 = vmatmul.bf16.gmra.mxu0 %v1678
        %v1819 = vpop.f32.mrf.mxu0
        %v1820 = vadd.f32 %v1720, %v1819
        %v1821 = vpop.f32.mrf.mxu0
        %v1822 = vadd.f32 %v1720, %v1821
        %1823 = vmatmul.bf16.gmra.mxu0 %v1679
        %v1824 = vpop.f32.mrf.mxu0
        %v1825 = vadd.f32 %v1720, %v1824
        %v1826 = vpop.f32.mrf.mxu0
        %v1827 = vadd.f32 %v1720, %v1826
        %1828 = vmatmul.bf16.gmra.mxu0 %v1680
        %v1829 = vpop.f32.mrf.mxu0
        %v1830 = vadd.f32 %v1720, %v1829
        %v1831 = vpop.f32.mrf.mxu0
        %v1832 = vadd.f32 %v1720, %v1831
        %1833 = vmatmul.bf16.gmra.mxu0 %v1681
        %v1834 = vpop.f32.mrf.mxu0
        %v1835 = vadd.f32 %v1720, %v1834
        %v1836 = vpop.f32.mrf.mxu0
        %v1837 = vadd.f32 %v1720, %v1836
        %1838 = vmatmul.bf16.gmra.mxu0 %v1682
        %v1839 = vpop.f32.mrf.mxu0
        %v1840 = vadd.f32 %v1720, %v1839
        %v1841 = vpop.f32.mrf.mxu0
        %v1842 = vadd.f32 %v1720, %v1841
        %1843 = vmatmul.bf16.gmra.mxu0 %v1683
        %v1844 = vpop.f32.mrf.mxu0
        %v1845 = vadd.f32 %v1720, %v1844
        %v1846 = vpop.f32.mrf.mxu0
        %v1847 = vadd.f32 %v1720, %v1846
        %1848 = vmatmul.bf16.gmra.mxu0 %v1684
        %v1849 = vpop.f32.mrf.mxu0
        %v1850 = vadd.f32 %v1720, %v1849
        %v1851 = vpop.f32.mrf.mxu0
        %v1852 = vadd.f32 %v1720, %v1851
        %1853 = vmatmul.bf16.gmra.mxu0 %v1685
        %v1854 = vpop.f32.mrf.mxu0
        %v1855 = vadd.f32 %v1720, %v1854
        %v1856 = vpop.f32.mrf.mxu0
        %v1857 = vadd.f32 %v1720, %v1856
        %1858 = vmatmul.bf16.gmra.mxu0 %v1686
        %v1859 = vpop.f32.mrf.mxu0
        %v1860 = vadd.f32 %v1720, %v1859
        %v1861 = vpop.f32.mrf.mxu0
        %v1862 = vadd.f32 %v1720, %v1861
        %1863 = vmatmul.bf16.gmra.mxu0 %v1687
        %v1864 = vpop.f32.mrf.mxu0
        %v1865 = vadd.f32 %v1720, %v1864
        %v1866 = vpop.f32.mrf.mxu0
        %v1867 = vadd.f32 %v1720, %v1866
        %1868 = vmatmul.bf16.gmra.mxu0 %v1688
        %v1869 = vpop.f32.mrf.mxu0
        %v1870 = vadd.f32 %v1720, %v1869
        %v1871 = vpop.f32.mrf.mxu0
        %v1872 = vadd.f32 %v1720, %v1871
        %1873 = vmatmul.bf16.gmra.mxu0 %v1689
        %v1874 = vpop.f32.mrf.mxu0
        %v1875 = vadd.f32 %v1720, %v1874
        %v1876 = vpop.f32.mrf.mxu0
        %v1877 = vadd.f32 %v1720, %v1876
        %1878 = vmatmul.bf16.gmra.mxu0 %v1690
        %v1879 = vpop.f32.mrf.mxu0
        %v1880 = vadd.f32 %v1720, %v1879
        %v1881 = vpop.f32.mrf.mxu0
        %v1882 = vadd.f32 %v1720, %v1881
        %1883 = vmatmul.bf16.gmra.mxu0 %v1691
        %v1884 = vpop.f32.mrf.mxu0
        %v1885 = vadd.f32 %v1720, %v1884
        %v1886 = vpop.f32.mrf.mxu0
        %v1887 = vadd.f32 %v1720, %v1886
        %1888 = vmatmul.bf16.gmra.mxu0 %v1692
        %v1889 = vpop.f32.mrf.mxu0
        %v1890 = vadd.f32 %v1720, %v1889
        %v1891 = vpop.f32.mrf.mxu0
        %v1892 = vadd.f32 %v1720, %v1891
        %1893 = vmatmul.bf16.gmra.mxu0 %v1693
        %v1894 = vpop.f32.mrf.mxu0
        %v1895 = vadd.f32 %v1720, %v1894
        %v1896 = vpop.f32.mrf.mxu0
        %v1897 = vadd.f32 %v1720, %v1896
        %1898 = vmatmul.bf16.gmra.mxu0 %v1694
        %v1899 = vpop.f32.mrf.mxu0
        %v1900 = vadd.f32 %v1720, %v1899
        %v1901 = vpop.f32.mrf.mxu0
        %v1902 = vadd.f32 %v1720, %v1901
        %1903 = vmatmul.bf16.gmra.mxu0 %v1695
        %v1904 = vpop.f32.mrf.mxu0
        %v1905 = vadd.f32 %v1720, %v1904
        %v1906 = vpop.f32.mrf.mxu0
        %v1907 = vadd.f32 %v1720, %v1906
        %1908 = vmatmul.bf16.gmra.mxu0 %v1696
        %v1909 = vpop.f32.mrf.mxu0
        %v1910 = vadd.f32 %v1720, %v1909
        %v1911 = vpop.f32.mrf.mxu0
        %v1912 = vadd.f32 %v1720, %v1911
        %1913 = vmatmul.bf16.gmra.mxu0 %v1697
        %v1914 = vpop.f32.mrf.mxu0
        %v1915 = vadd.f32 %v1720, %v1914
        %v1916 = vpop.f32.mrf.mxu0
        %v1917 = vadd.f32 %v1720, %v1916
        %1918 = vmatmul.bf16.gmra.mxu0 %v1698
        %v1919 = vpop.f32.mrf.mxu0
        %v1920 = vadd.f32 %v1720, %v1919
        %v1921 = vpop.f32.mrf.mxu0
        %v1922 = vadd.f32 %v1720, %v1921
        %1923 = vmatmul.bf16.gmra.mxu0 %v1699
        %v1924 = vpop.f32.mrf.mxu0
        %v1925 = vadd.f32 %v1720, %v1924
        %v1926 = vpop.f32.mrf.mxu0
        %v1927 = vadd.f32 %v1720, %v1926
        %1928 = vmatmul.bf16.gmra.mxu0 %v1700
        %v1929 = vpop.f32.mrf.mxu0
        %v1930 = vadd.f32 %v1720, %v1929
        %v1931 = vpop.f32.mrf.mxu0
        %v1932 = vadd.f32 %v1720, %v1931
        %1933 = vmatmul.bf16.gmra.mxu0 %v1701
        %v1934 = vpop.f32.mrf.mxu0
        %v1935 = vadd.f32 %v1720, %v1934
        %v1936 = vpop.f32.mrf.mxu0
        %v1937 = vadd.f32 %v1720, %v1936
        %1938 = vdwg.mxu0
        %v1939 = vmax.f32 %v1780, 0.0
        %v1940 = vmax.f32 %v1782, 0.0
        %v1941 = vmax.f32 %v1785, 0.0
        %v1942 = vmax.f32 %v1787, 0.0
        %v1943 = vmax.f32 %v1790, 0.0
        %v1944 = vmax.f32 %v1792, 0.0
        %v1945 = vmax.f32 %v1795, 0.0
        %v1946 = vmax.f32 %v1797, 0.0
        %v1947 = vmax.f32 %v1800, 0.0
        %v1948 = vmax.f32 %v1802, 0.0
        %v1949 = vmax.f32 %v1805, 0.0
        %v1950 = vmax.f32 %v1807, 0.0
        %v1951 = vmax.f32 %v1810, 0.0
        %v1952 = vmax.f32 %v1812, 0.0
        %v1953 = vmax.f32 %v1815, 0.0
        %v1954 = vmax.f32 %v1817, 0.0
        %v1955 = vmax.f32 %v1820, 0.0
        %v1956 = vmax.f32 %v1822, 0.0
        %v1957 = vmax.f32 %v1825, 0.0
        %v1958 = vmax.f32 %v1827, 0.0
        %v1959 = vmax.f32 %v1830, 0.0
        %v1960 = vmax.f32 %v1832, 0.0
        %v1961 = vmax.f32 %v1835, 0.0
        %v1962 = vmax.f32 %v1837, 0.0
        %v1963 = vmax.f32 %v1840, 0.0
        %v1964 = vmax.f32 %v1842, 0.0
        %v1965 = vmax.f32 %v1845, 0.0
        %v1966 = vmax.f32 %v1847, 0.0
        %v1967 = vmax.f32 %v1850, 0.0
        %v1968 = vmax.f32 %v1852, 0.0
        %v1969 = vmax.f32 %v1855, 0.0
        %v1970 = vmax.f32 %v1857, 0.0
        %v1971 = vmax.f32 %v1860, 0.0
        %v1972 = vmax.f32 %v1862, 0.0
        %v1973 = vmax.f32 %v1865, 0.0
        %v1974 = vmax.f32 %v1867, 0.0
        %v1975 = vmax.f32 %v1870, 0.0
        %v1976 = vmax.f32 %v1872, 0.0
        %v1977 = vmax.f32 %v1875, 0.0
        %v1978 = vmax.f32 %v1877, 0.0
        %v1979 = vmax.f32 %v1880, 0.0
        %v1980 = vmax.f32 %v1882, 0.0
        %v1981 = vmax.f32 %v1885, 0.0
        %v1982 = vmax.f32 %v1887, 0.0
        %v1983 = vmax.f32 %v1890, 0.0
        %v1984 = vmax.f32 %v1892, 0.0
        %v1985 = vmax.f32 %v1895, 0.0
        %v1986 = vmax.f32 %v1897, 0.0
        %v1987 = vmax.f32 %v1900, 0.0
        %v1988 = vmax.f32 %v1902, 0.0
        %v1989 = vmax.f32 %v1905, 0.0
        %v1990 = vmax.f32 %v1907, 0.0
        %v1991 = vmax.f32 %v1910, 0.0
        %v1992 = vmax.f32 %v1912, 0.0
        %v1993 = vmax.f32 %v1915, 0.0
        %v1994 = vmax.f32 %v1917, 0.0
        %v1995 = vmax.f32 %v1920, 0.0
        %v1996 = vmax.f32 %v1922, 0.0
        %v1997 = vmax.f32 %v1925, 0.0
        %v1998 = vmax.f32 %v1927, 0.0
        %v1999 = vmax.f32 %v1930, 0.0
        %v2000 = vmax.f32 %v1932, 0.0
        %v2001 = vmax.f32 %v1935, 0.0
        %v2002 = vmax.f32 %v1937, 0.0
        %v2003 = vrot.slane %v1939, 4
        %v2004 = vmax.f32 %v1939, %v2003
        %v2005 = vrot.slane %v2004, 2
        %v2006 = vmax.f32 %v2004, %v2005
        %v2007 = vrot.slane %v2006, 1
        %v2008 = vmax.f32 %v2006, %v2007
        %v2009 = vrot.slane %v1940, 4
        %v2010 = vmax.f32 %v1940, %v2009
        %v2011 = vrot.slane %v2010, 2
        %v2012 = vmax.f32 %v2010, %v2011
        %v2013 = vrot.slane %v2012, 1
        %v2014 = vmax.f32 %v2012, %v2013
        %v2015 = vrot.slane %v1941, 4
        %v2016 = vmax.f32 %v1941, %v2015
        %v2017 = vrot.slane %v2016, 2
        %v2018 = vmax.f32 %v2016, %v2017
        %v2019 = vrot.slane %v2018, 1
        %v2020 = vmax.f32 %v2018, %v2019
        %v2021 = vrot.slane %v1942, 4
        %v2022 = vmax.f32 %v1942, %v2021
        %v2023 = vrot.slane %v2022, 2
        %v2024 = vmax.f32 %v2022, %v2023
        %v2025 = vrot.slane %v2024, 1
        %v2026 = vmax.f32 %v2024, %v2025
        %v2027 = vrot.slane %v1943, 4
        %v2028 = vmax.f32 %v1943, %v2027
        %v2029 = vrot.slane %v2028, 2
        %v2030 = vmax.f32 %v2028, %v2029
        %v2031 = vrot.slane %v2030, 1
        %v2032 = vmax.f32 %v2030, %v2031
        %v2033 = vrot.slane %v1944, 4
        %v2034 = vmax.f32 %v1944, %v2033
        %v2035 = vrot.slane %v2034, 2
        %v2036 = vmax.f32 %v2034, %v2035
        %v2037 = vrot.slane %v2036, 1
        %v2038 = vmax.f32 %v2036, %v2037
        %v2039 = vrot.slane %v1945, 4
        %v2040 = vmax.f32 %v1945, %v2039
        %v2041 = vrot.slane %v2040, 2
        %v2042 = vmax.f32 %v2040, %v2041
        %v2043 = vrot.slane %v2042, 1
        %v2044 = vmax.f32 %v2042, %v2043
        %v2045 = vrot.slane %v1946, 4
        %v2046 = vmax.f32 %v1946, %v2045
        %v2047 = vrot.slane %v2046, 2
        %v2048 = vmax.f32 %v2046, %v2047
        %v2049 = vrot.slane %v2048, 1
        %v2050 = vmax.f32 %v2048, %v2049
        %v2051 = vrot.slane %v1947, 4
        %v2052 = vmax.f32 %v1947, %v2051
        %v2053 = vrot.slane %v2052, 2
        %v2054 = vmax.f32 %v2052, %v2053
        %v2055 = vrot.slane %v2054, 1
        %v2056 = vmax.f32 %v2054, %v2055
        %v2057 = vrot.slane %v1948, 4
        %v2058 = vmax.f32 %v1948, %v2057
        %v2059 = vrot.slane %v2058, 2
        %v2060 = vmax.f32 %v2058, %v2059
        %v2061 = vrot.slane %v2060, 1
        %v2062 = vmax.f32 %v2060, %v2061
        %v2063 = vrot.slane %v1949, 4
        %v2064 = vmax.f32 %v1949, %v2063
        %v2065 = vrot.slane %v2064, 2
        %v2066 = vmax.f32 %v2064, %v2065
        %v2067 = vrot.slane %v2066, 1
        %v2068 = vmax.f32 %v2066, %v2067
        %v2069 = vrot.slane %v1950, 4
        %v2070 = vmax.f32 %v1950, %v2069
        %v2071 = vrot.slane %v2070, 2
        %v2072 = vmax.f32 %v2070, %v2071
        %v2073 = vrot.slane %v2072, 1
        %v2074 = vmax.f32 %v2072, %v2073
        %v2075 = vrot.slane %v1951, 4
        %v2076 = vmax.f32 %v1951, %v2075
        %v2077 = vrot.slane %v2076, 2
        %v2078 = vmax.f32 %v2076, %v2077
        %v2079 = vrot.slane %v2078, 1
        %v2080 = vmax.f32 %v2078, %v2079
        %v2081 = vrot.slane %v1952, 4
        %v2082 = vmax.f32 %v1952, %v2081
        %v2083 = vrot.slane %v2082, 2
        %v2084 = vmax.f32 %v2082, %v2083
        %v2085 = vrot.slane %v2084, 1
        %v2086 = vmax.f32 %v2084, %v2085
        %v2087 = vrot.slane %v1953, 4
        %v2088 = vmax.f32 %v1953, %v2087
        %v2089 = vrot.slane %v2088, 2
        %v2090 = vmax.f32 %v2088, %v2089
        %v2091 = vrot.slane %v2090, 1
        %v2092 = vmax.f32 %v2090, %v2091
        %v2093 = vrot.slane %v1954, 4
        %v2094 = vmax.f32 %v1954, %v2093
        %v2095 = vrot.slane %v2094, 2
        %v2096 = vmax.f32 %v2094, %v2095
        %v2097 = vrot.slane %v2096, 1
        %v2098 = vmax.f32 %v2096, %v2097
        %v2099 = vrot.slane %v1955, 4
        %v2100 = vmax.f32 %v1955, %v2099
        %v2101 = vrot.slane %v2100, 2
        %v2102 = vmax.f32 %v2100, %v2101
        %v2103 = vrot.slane %v2102, 1
        %v2104 = vmax.f32 %v2102, %v2103
        %v2105 = vrot.slane %v1956, 4
        %v2106 = vmax.f32 %v1956, %v2105
        %v2107 = vrot.slane %v2106, 2
        %v2108 = vmax.f32 %v2106, %v2107
        %v2109 = vrot.slane %v2108, 1
        %v2110 = vmax.f32 %v2108, %v2109
        %v2111 = vrot.slane %v1957, 4
        %v2112 = vmax.f32 %v1957, %v2111
        %v2113 = vrot.slane %v2112, 2
        %v2114 = vmax.f32 %v2112, %v2113
        %v2115 = vrot.slane %v2114, 1
        %v2116 = vmax.f32 %v2114, %v2115
        %v2117 = vrot.slane %v1958, 4
        %v2118 = vmax.f32 %v1958, %v2117
        %v2119 = vrot.slane %v2118, 2
        %v2120 = vmax.f32 %v2118, %v2119
        %v2121 = vrot.slane %v2120, 1
        %v2122 = vmax.f32 %v2120, %v2121
        %v2123 = vrot.slane %v1959, 4
        %v2124 = vmax.f32 %v1959, %v2123
        %v2125 = vrot.slane %v2124, 2
        %v2126 = vmax.f32 %v2124, %v2125
        %v2127 = vrot.slane %v2126, 1
        %v2128 = vmax.f32 %v2126, %v2127
        %v2129 = vrot.slane %v1960, 4
        %v2130 = vmax.f32 %v1960, %v2129
        %v2131 = vrot.slane %v2130, 2
        %v2132 = vmax.f32 %v2130, %v2131
        %v2133 = vrot.slane %v2132, 1
        %v2134 = vmax.f32 %v2132, %v2133
        %v2135 = vrot.slane %v1961, 4
        %v2136 = vmax.f32 %v1961, %v2135
        %v2137 = vrot.slane %v2136, 2
        %v2138 = vmax.f32 %v2136, %v2137
        %v2139 = vrot.slane %v2138, 1
        %v2140 = vmax.f32 %v2138, %v2139
        %v2141 = vrot.slane %v1962, 4
        %v2142 = vmax.f32 %v1962, %v2141
        %v2143 = vrot.slane %v2142, 2
        %v2144 = vmax.f32 %v2142, %v2143
        %v2145 = vrot.slane %v2144, 1
        %v2146 = vmax.f32 %v2144, %v2145
        %v2147 = vrot.slane %v1963, 4
        %v2148 = vmax.f32 %v1963, %v2147
        %v2149 = vrot.slane %v2148, 2
        %v2150 = vmax.f32 %v2148, %v2149
        %v2151 = vrot.slane %v2150, 1
        %v2152 = vmax.f32 %v2150, %v2151
        %v2153 = vrot.slane %v1964, 4
        %v2154 = vmax.f32 %v1964, %v2153
        %v2155 = vrot.slane %v2154, 2
        %v2156 = vmax.f32 %v2154, %v2155
        %v2157 = vrot.slane %v2156, 1
        %v2158 = vmax.f32 %v2156, %v2157
        %v2159 = vrot.slane %v1965, 4
        %v2160 = vmax.f32 %v1965, %v2159
        %v2161 = vrot.slane %v2160, 2
        %v2162 = vmax.f32 %v2160, %v2161
        %v2163 = vrot.slane %v2162, 1
        %v2164 = vmax.f32 %v2162, %v2163
        %v2165 = vrot.slane %v1966, 4
        %v2166 = vmax.f32 %v1966, %v2165
        %v2167 = vrot.slane %v2166, 2
        %v2168 = vmax.f32 %v2166, %v2167
        %v2169 = vrot.slane %v2168, 1
        %v2170 = vmax.f32 %v2168, %v2169
        %v2171 = vrot.slane %v1967, 4
        %v2172 = vmax.f32 %v1967, %v2171
        %v2173 = vrot.slane %v2172, 2
        %v2174 = vmax.f32 %v2172, %v2173
        %v2175 = vrot.slane %v2174, 1
        %v2176 = vmax.f32 %v2174, %v2175
        %v2177 = vrot.slane %v1968, 4
        %v2178 = vmax.f32 %v1968, %v2177
        %v2179 = vrot.slane %v2178, 2
        %v2180 = vmax.f32 %v2178, %v2179
        %v2181 = vrot.slane %v2180, 1
        %v2182 = vmax.f32 %v2180, %v2181
        %v2183 = vrot.slane %v1969, 4
        %v2184 = vmax.f32 %v1969, %v2183
        %v2185 = vrot.slane %v2184, 2
        %v2186 = vmax.f32 %v2184, %v2185
        %v2187 = vrot.slane %v2186, 1
        %v2188 = vmax.f32 %v2186, %v2187
        %v2189 = vrot.slane %v1970, 4
        %v2190 = vmax.f32 %v1970, %v2189
        %v2191 = vrot.slane %v2190, 2
        %v2192 = vmax.f32 %v2190, %v2191
        %v2193 = vrot.slane %v2192, 1
        %v2194 = vmax.f32 %v2192, %v2193
        %v2195 = vrot.slane %v1971, 4
        %v2196 = vmax.f32 %v1971, %v2195
        %v2197 = vrot.slane %v2196, 2
        %v2198 = vmax.f32 %v2196, %v2197
        %v2199 = vrot.slane %v2198, 1
        %v2200 = vmax.f32 %v2198, %v2199
        %v2201 = vrot.slane %v1972, 4
        %v2202 = vmax.f32 %v1972, %v2201
        %v2203 = vrot.slane %v2202, 2
        %v2204 = vmax.f32 %v2202, %v2203
        %v2205 = vrot.slane %v2204, 1
        %v2206 = vmax.f32 %v2204, %v2205
        %v2207 = vrot.slane %v1973, 4
        %v2208 = vmax.f32 %v1973, %v2207
        %v2209 = vrot.slane %v2208, 2
        %v2210 = vmax.f32 %v2208, %v2209
        %v2211 = vrot.slane %v2210, 1
        %v2212 = vmax.f32 %v2210, %v2211
        %v2213 = vrot.slane %v1974, 4
        %v2214 = vmax.f32 %v1974, %v2213
        %v2215 = vrot.slane %v2214, 2
        %v2216 = vmax.f32 %v2214, %v2215
        %v2217 = vrot.slane %v2216, 1
        %v2218 = vmax.f32 %v2216, %v2217
        %v2219 = vrot.slane %v1975, 4
        %v2220 = vmax.f32 %v1975, %v2219
        %v2221 = vrot.slane %v2220, 2
        %v2222 = vmax.f32 %v2220, %v2221
        %v2223 = vrot.slane %v2222, 1
        %v2224 = vmax.f32 %v2222, %v2223
        %v2225 = vrot.slane %v1976, 4
        %v2226 = vmax.f32 %v1976, %v2225
        %v2227 = vrot.slane %v2226, 2
        %v2228 = vmax.f32 %v2226, %v2227
        %v2229 = vrot.slane %v2228, 1
        %v2230 = vmax.f32 %v2228, %v2229
        %v2231 = vrot.slane %v1977, 4
        %v2232 = vmax.f32 %v1977, %v2231
        %v2233 = vrot.slane %v2232, 2
        %v2234 = vmax.f32 %v2232, %v2233
        %v2235 = vrot.slane %v2234, 1
        %v2236 = vmax.f32 %v2234, %v2235
        %v2237 = vrot.slane %v1978, 4
        %v2238 = vmax.f32 %v1978, %v2237
        %v2239 = vrot.slane %v2238, 2
        %v2240 = vmax.f32 %v2238, %v2239
        %v2241 = vrot.slane %v2240, 1
        %v2242 = vmax.f32 %v2240, %v2241
        %v2243 = vrot.slane %v1979, 4
        %v2244 = vmax.f32 %v1979, %v2243
        %v2245 = vrot.slane %v2244, 2
        %v2246 = vmax.f32 %v2244, %v2245
        %v2247 = vrot.slane %v2246, 1
        %v2248 = vmax.f32 %v2246, %v2247
        %v2249 = vrot.slane %v1980, 4
        %v2250 = vmax.f32 %v1980, %v2249
        %v2251 = vrot.slane %v2250, 2
        %v2252 = vmax.f32 %v2250, %v2251
        %v2253 = vrot.slane %v2252, 1
        %v2254 = vmax.f32 %v2252, %v2253
        %v2255 = vrot.slane %v1981, 4
        %v2256 = vmax.f32 %v1981, %v2255
        %v2257 = vrot.slane %v2256, 2
        %v2258 = vmax.f32 %v2256, %v2257
        %v2259 = vrot.slane %v2258, 1
        %v2260 = vmax.f32 %v2258, %v2259
        %v2261 = vrot.slane %v1982, 4
        %v2262 = vmax.f32 %v1982, %v2261
        %v2263 = vrot.slane %v2262, 2
        %v2264 = vmax.f32 %v2262, %v2263
        %v2265 = vrot.slane %v2264, 1
        %v2266 = vmax.f32 %v2264, %v2265
        %v2267 = vrot.slane %v1983, 4
        %v2268 = vmax.f32 %v1983, %v2267
        %v2269 = vrot.slane %v2268, 2
        %v2270 = vmax.f32 %v2268, %v2269
        %v2271 = vrot.slane %v2270, 1
        %v2272 = vmax.f32 %v2270, %v2271
        %v2273 = vrot.slane %v1984, 4
        %v2274 = vmax.f32 %v1984, %v2273
        %v2275 = vrot.slane %v2274, 2
        %v2276 = vmax.f32 %v2274, %v2275
        %v2277 = vrot.slane %v2276, 1
        %v2278 = vmax.f32 %v2276, %v2277
        %v2279 = vrot.slane %v1985, 4
        %v2280 = vmax.f32 %v1985, %v2279
        %v2281 = vrot.slane %v2280, 2
        %v2282 = vmax.f32 %v2280, %v2281
        %v2283 = vrot.slane %v2282, 1
        %v2284 = vmax.f32 %v2282, %v2283
        %v2285 = vrot.slane %v1986, 4
        %v2286 = vmax.f32 %v1986, %v2285
        %v2287 = vrot.slane %v2286, 2
        %v2288 = vmax.f32 %v2286, %v2287
        %v2289 = vrot.slane %v2288, 1
        %v2290 = vmax.f32 %v2288, %v2289
        %v2291 = vrot.slane %v1987, 4
        %v2292 = vmax.f32 %v1987, %v2291
        %v2293 = vrot.slane %v2292, 2
        %v2294 = vmax.f32 %v2292, %v2293
        %v2295 = vrot.slane %v2294, 1
        %v2296 = vmax.f32 %v2294, %v2295
        %v2297 = vrot.slane %v1988, 4
        %v2298 = vmax.f32 %v1988, %v2297
        %v2299 = vrot.slane %v2298, 2
        %v2300 = vmax.f32 %v2298, %v2299
        %v2301 = vrot.slane %v2300, 1
        %v2302 = vmax.f32 %v2300, %v2301
        %v2303 = vrot.slane %v1989, 4
        %v2304 = vmax.f32 %v1989, %v2303
        %v2305 = vrot.slane %v2304, 2
        %v2306 = vmax.f32 %v2304, %v2305
        %v2307 = vrot.slane %v2306, 1
        %v2308 = vmax.f32 %v2306, %v2307
        %v2309 = vrot.slane %v1990, 4
        %v2310 = vmax.f32 %v1990, %v2309
        %v2311 = vrot.slane %v2310, 2
        %v2312 = vmax.f32 %v2310, %v2311
        %v2313 = vrot.slane %v2312, 1
        %v2314 = vmax.f32 %v2312, %v2313
        %v2315 = vrot.slane %v1991, 4
        %v2316 = vmax.f32 %v1991, %v2315
        %v2317 = vrot.slane %v2316, 2
        %v2318 = vmax.f32 %v2316, %v2317
        %v2319 = vrot.slane %v2318, 1
        %v2320 = vmax.f32 %v2318, %v2319
        %v2321 = vrot.slane %v1992, 4
        %v2322 = vmax.f32 %v1992, %v2321
        %v2323 = vrot.slane %v2322, 2
        %v2324 = vmax.f32 %v2322, %v2323
        %v2325 = vrot.slane %v2324, 1
        %v2326 = vmax.f32 %v2324, %v2325
        %v2327 = vrot.slane %v1993, 4
        %v2328 = vmax.f32 %v1993, %v2327
        %v2329 = vrot.slane %v2328, 2
        %v2330 = vmax.f32 %v2328, %v2329
        %v2331 = vrot.slane %v2330, 1
        %v2332 = vmax.f32 %v2330, %v2331
        %v2333 = vrot.slane %v1994, 4
        %v2334 = vmax.f32 %v1994, %v2333
        %v2335 = vrot.slane %v2334, 2
        %v2336 = vmax.f32 %v2334, %v2335
        %v2337 = vrot.slane %v2336, 1
        %v2338 = vmax.f32 %v2336, %v2337
        %v2339 = vrot.slane %v1995, 4
        %v2340 = vmax.f32 %v1995, %v2339
        %v2341 = vrot.slane %v2340, 2
        %v2342 = vmax.f32 %v2340, %v2341
        %v2343 = vrot.slane %v2342, 1
        %v2344 = vmax.f32 %v2342, %v2343
        %v2345 = vrot.slane %v1996, 4
        %v2346 = vmax.f32 %v1996, %v2345
        %v2347 = vrot.slane %v2346, 2
        %v2348 = vmax.f32 %v2346, %v2347
        %v2349 = vrot.slane %v2348, 1
        %v2350 = vmax.f32 %v2348, %v2349
        %v2351 = vrot.slane %v1997, 4
        %v2352 = vmax.f32 %v1997, %v2351
        %v2353 = vrot.slane %v2352, 2
        %v2354 = vmax.f32 %v2352, %v2353
        %v2355 = vrot.slane %v2354, 1
        %v2356 = vmax.f32 %v2354, %v2355
        %v2357 = vrot.slane %v1998, 4
        %v2358 = vmax.f32 %v1998, %v2357
        %v2359 = vrot.slane %v2358, 2
        %v2360 = vmax.f32 %v2358, %v2359
        %v2361 = vrot.slane %v2360, 1
        %v2362 = vmax.f32 %v2360, %v2361
        %v2363 = vrot.slane %v1999, 4
        %v2364 = vmax.f32 %v1999, %v2363
        %v2365 = vrot.slane %v2364, 2
        %v2366 = vmax.f32 %v2364, %v2365
        %v2367 = vrot.slane %v2366, 1
        %v2368 = vmax.f32 %v2366, %v2367
        %v2369 = vrot.slane %v2000, 4
        %v2370 = vmax.f32 %v2000, %v2369
        %v2371 = vrot.slane %v2370, 2
        %v2372 = vmax.f32 %v2370, %v2371
        %v2373 = vrot.slane %v2372, 1
        %v2374 = vmax.f32 %v2372, %v2373
        %v2375 = vrot.slane %v2001, 4
        %v2376 = vmax.f32 %v2001, %v2375
        %v2377 = vrot.slane %v2376, 2
        %v2378 = vmax.f32 %v2376, %v2377
        %v2379 = vrot.slane %v2378, 1
        %v2380 = vmax.f32 %v2378, %v2379
        %v2381 = vrot.slane %v2002, 4
        %v2382 = vmax.f32 %v2002, %v2381
        %v2383 = vrot.slane %v2382, 2
        %v2384 = vmax.f32 %v2382, %v2383
        %v2385 = vrot.slane %v2384, 1
        %v2386 = vmax.f32 %v2384, %v2385
        %v2387 = vld [vmem:[%s7] sm:$0x1]
        %v2389 = vperm.slane %v2387, 0
        %v2391 = vmul.f32 %v2008, %v2389
        %v2392 = vmul.f32 %v2014, %v2389
        %v2393 = vmul.f32 %v2020, %v2389
        %v2394 = vmul.f32 %v2026, %v2389
        %v2395 = vmul.f32 %v2032, %v2389
        %v2396 = vmul.f32 %v2038, %v2389
        %v2397 = vmul.f32 %v2044, %v2389
        %v2398 = vmul.f32 %v2050, %v2389
        %v2399 = vmul.f32 %v2056, %v2389
        %v2400 = vmul.f32 %v2062, %v2389
        %v2401 = vmul.f32 %v2068, %v2389
        %v2402 = vmul.f32 %v2074, %v2389
        %v2403 = vmul.f32 %v2080, %v2389
        %v2404 = vmul.f32 %v2086, %v2389
        %v2405 = vmul.f32 %v2092, %v2389
        %v2406 = vmul.f32 %v2098, %v2389
        %v2407 = vmul.f32 %v2104, %v2389
        %v2408 = vmul.f32 %v2110, %v2389
        %v2409 = vmul.f32 %v2116, %v2389
        %v2410 = vmul.f32 %v2122, %v2389
        %v2411 = vmul.f32 %v2128, %v2389
        %v2412 = vmul.f32 %v2134, %v2389
        %v2413 = vmul.f32 %v2140, %v2389
        %v2414 = vmul.f32 %v2146, %v2389
        %v2415 = vmul.f32 %v2152, %v2389
        %v2416 = vmul.f32 %v2158, %v2389
        %v2417 = vmul.f32 %v2164, %v2389
        %v2418 = vmul.f32 %v2170, %v2389
        %v2419 = vmul.f32 %v2176, %v2389
        %v2420 = vmul.f32 %v2182, %v2389
        %v2421 = vmul.f32 %v2188, %v2389
        %v2422 = vmul.f32 %v2194, %v2389
        %v2423 = vmul.f32 %v2200, %v2389
        %v2424 = vmul.f32 %v2206, %v2389
        %v2425 = vmul.f32 %v2212, %v2389
        %v2426 = vmul.f32 %v2218, %v2389
        %v2427 = vmul.f32 %v2224, %v2389
        %v2428 = vmul.f32 %v2230, %v2389
        %v2429 = vmul.f32 %v2236, %v2389
        %v2430 = vmul.f32 %v2242, %v2389
        %v2431 = vmul.f32 %v2248, %v2389
        %v2432 = vmul.f32 %v2254, %v2389
        %v2433 = vmul.f32 %v2260, %v2389
        %v2434 = vmul.f32 %v2266, %v2389
        %v2435 = vmul.f32 %v2272, %v2389
        %v2436 = vmul.f32 %v2278, %v2389
        %v2437 = vmul.f32 %v2284, %v2389
        %v2438 = vmul.f32 %v2290, %v2389
        %v2439 = vmul.f32 %v2296, %v2389
        %v2440 = vmul.f32 %v2302, %v2389
        %v2441 = vmul.f32 %v2308, %v2389
        %v2442 = vmul.f32 %v2314, %v2389
        %v2443 = vmul.f32 %v2320, %v2389
        %v2444 = vmul.f32 %v2326, %v2389
        %v2445 = vmul.f32 %v2332, %v2389
        %v2446 = vmul.f32 %v2338, %v2389
        %v2447 = vmul.f32 %v2344, %v2389
        %v2448 = vmul.f32 %v2350, %v2389
        %v2449 = vmul.f32 %v2356, %v2389
        %v2450 = vmul.f32 %v2362, %v2389
        %v2451 = vmul.f32 %v2368, %v2389
        %v2452 = vmul.f32 %v2374, %v2389
        %v2453 = vmul.f32 %v2380, %v2389
        %v2454 = vmul.f32 %v2386, %v2389
        %v2519 = vrot.slane %v2392, 7
        %vm2520 = vcmask 1041409
        %v2521 = vsel %vm2520, %v2519, %v2391
        %v2522 = vrot.slane %v2393, 6
        %vm2523 = vcmask 1042434
        %v2524 = vsel %vm2523, %v2522, %v2521
        %v2525 = vrot.slane %v2394, 5
        %vm2526 = vcmask 1043459
        %v2527 = vsel %vm2526, %v2525, %v2524
        %v2528 = vrot.slane %v2395, 4
        %vm2529 = vcmask 1044484
        %v2530 = vsel %vm2529, %v2528, %v2527
        %v2531 = vrot.slane %v2396, 3
        %vm2532 = vcmask 1045509
        %v2533 = vsel %vm2532, %v2531, %v2530
        %v2534 = vrot.slane %v2397, 2
        %vm2535 = vcmask 1046534
        %v2536 = vsel %vm2535, %v2534, %v2533
        %v2537 = vrot.slane %v2398, 1
        %vm2538 = vcmask 1047559
        %v2539 = vsel %vm2538, %v2537, %v2536
        %v2540 = vrot.slane %v2400, 7
        %v2541 = vsel %vm2520, %v2540, %v2399
        %v2542 = vrot.slane %v2401, 6
        %v2543 = vsel %vm2523, %v2542, %v2541
        %v2544 = vrot.slane %v2402, 5
        %v2545 = vsel %vm2526, %v2544, %v2543
        %v2546 = vrot.slane %v2403, 4
        %v2547 = vsel %vm2529, %v2546, %v2545
        %v2548 = vrot.slane %v2404, 3
        %v2549 = vsel %vm2532, %v2548, %v2547
        %v2550 = vrot.slane %v2405, 2
        %v2551 = vsel %vm2535, %v2550, %v2549
        %v2552 = vrot.slane %v2406, 1
        %v2553 = vsel %vm2538, %v2552, %v2551
        %v2554 = vrot.slane %v2408, 7
        %v2555 = vsel %vm2520, %v2554, %v2407
        %v2556 = vrot.slane %v2409, 6
        %v2557 = vsel %vm2523, %v2556, %v2555
        %v2558 = vrot.slane %v2410, 5
        %v2559 = vsel %vm2526, %v2558, %v2557
        %v2560 = vrot.slane %v2411, 4
        %v2561 = vsel %vm2529, %v2560, %v2559
        %v2562 = vrot.slane %v2412, 3
        %v2563 = vsel %vm2532, %v2562, %v2561
        %v2564 = vrot.slane %v2413, 2
        %v2565 = vsel %vm2535, %v2564, %v2563
        %v2566 = vrot.slane %v2414, 1
        %v2567 = vsel %vm2538, %v2566, %v2565
        %v2568 = vrot.slane %v2416, 7
        %v2569 = vsel %vm2520, %v2568, %v2415
        %v2570 = vrot.slane %v2417, 6
        %v2571 = vsel %vm2523, %v2570, %v2569
        %v2572 = vrot.slane %v2418, 5
        %v2573 = vsel %vm2526, %v2572, %v2571
        %v2574 = vrot.slane %v2419, 4
        %v2575 = vsel %vm2529, %v2574, %v2573
        %v2576 = vrot.slane %v2420, 3
        %v2577 = vsel %vm2532, %v2576, %v2575
        %v2578 = vrot.slane %v2421, 2
        %v2579 = vsel %vm2535, %v2578, %v2577
        %v2580 = vrot.slane %v2422, 1
        %v2581 = vsel %vm2538, %v2580, %v2579
        %v2582 = vrot.slane %v2424, 7
        %v2583 = vsel %vm2520, %v2582, %v2423
        %v2584 = vrot.slane %v2425, 6
        %v2585 = vsel %vm2523, %v2584, %v2583
        %v2586 = vrot.slane %v2426, 5
        %v2587 = vsel %vm2526, %v2586, %v2585
        %v2588 = vrot.slane %v2427, 4
        %v2589 = vsel %vm2529, %v2588, %v2587
        %v2590 = vrot.slane %v2428, 3
        %v2591 = vsel %vm2532, %v2590, %v2589
        %v2592 = vrot.slane %v2429, 2
        %v2593 = vsel %vm2535, %v2592, %v2591
        %v2594 = vrot.slane %v2430, 1
        %v2595 = vsel %vm2538, %v2594, %v2593
        %v2596 = vrot.slane %v2432, 7
        %v2597 = vsel %vm2520, %v2596, %v2431
        %v2598 = vrot.slane %v2433, 6
        %v2599 = vsel %vm2523, %v2598, %v2597
        %v2600 = vrot.slane %v2434, 5
        %v2601 = vsel %vm2526, %v2600, %v2599
        %v2602 = vrot.slane %v2435, 4
        %v2603 = vsel %vm2529, %v2602, %v2601
        %v2604 = vrot.slane %v2436, 3
        %v2605 = vsel %vm2532, %v2604, %v2603
        %v2606 = vrot.slane %v2437, 2
        %v2607 = vsel %vm2535, %v2606, %v2605
        %v2608 = vrot.slane %v2438, 1
        %v2609 = vsel %vm2538, %v2608, %v2607
        %v2610 = vrot.slane %v2440, 7
        %v2611 = vsel %vm2520, %v2610, %v2439
        %v2612 = vrot.slane %v2441, 6
        %v2613 = vsel %vm2523, %v2612, %v2611
        %v2614 = vrot.slane %v2442, 5
        %v2615 = vsel %vm2526, %v2614, %v2613
        %v2616 = vrot.slane %v2443, 4
        %v2617 = vsel %vm2529, %v2616, %v2615
        %v2618 = vrot.slane %v2444, 3
        %v2619 = vsel %vm2532, %v2618, %v2617
        %v2620 = vrot.slane %v2445, 2
        %v2621 = vsel %vm2535, %v2620, %v2619
        %v2622 = vrot.slane %v2446, 1
        %v2623 = vsel %vm2538, %v2622, %v2621
        %v2624 = vrot.slane %v2448, 7
        %v2625 = vsel %vm2520, %v2624, %v2447
        %v2626 = vrot.slane %v2449, 6
        %v2627 = vsel %vm2523, %v2626, %v2625
        %v2628 = vrot.slane %v2450, 5
        %v2629 = vsel %vm2526, %v2628, %v2627
        %v2630 = vrot.slane %v2451, 4
        %v2631 = vsel %vm2529, %v2630, %v2629
        %v2632 = vrot.slane %v2452, 3
        %v2633 = vsel %vm2532, %v2632, %v2631
        %v2634 = vrot.slane %v2453, 2
        %v2635 = vsel %vm2535, %v2634, %v2633
        %v2636 = vrot.slane %v2454, 1
        %v2637 = vsel %vm2538, %v2636, %v2635
        %2646 = vadd.xlane.f32.xlu0 %v2539
        %v2647 = vpop.xlane.xlu0 %2646
        %2648 = vadd.xlane.f32.xlu0 %v2553
        %v2649 = vpop.xlane.xlu0 %2648
        %2650 = vadd.xlane.f32.xlu0 %v2567
        %v2651 = vpop.xlane.xlu0 %2650
        %2652 = vadd.xlane.f32.xlu0 %v2581
        %v2653 = vpop.xlane.xlu0 %2652
        %2654 = vadd.xlane.f32.xlu0 %v2595
        %v2655 = vpop.xlane.xlu0 %2654
        %2656 = vadd.xlane.f32.xlu0 %v2609
        %v2657 = vpop.xlane.xlu0 %2656
        %2658 = vadd.xlane.f32.xlu0 %v2623
        %v2659 = vpop.xlane.xlu0 %2658
        %2660 = vadd.xlane.f32.xlu0 %v2637
        %v2661 = vpop.xlane.xlu0 %2660
        %s2662 = sld [smem:[#allocation2]]
        %v2663 = vstv %s2662
        %v2664 = vadd.f32 %v2647, %v2663
        %v2665 = vadd.f32 %v2649, %v2663
        %v2666 = vadd.f32 %v2651, %v2663
        %v2667 = vadd.f32 %v2653, %v2663
        %v2668 = vadd.f32 %v2655, %v2663
        %v2669 = vadd.f32 %v2657, %v2663
        %v2670 = vadd.f32 %v2659, %v2663
        %v2671 = vadd.f32 %v2661, %v2663
        %v2672 = vxor.u32 %v2664, 2147483648
        %v2673 = vxor.u32 %v2665, 2147483648
        %v2674 = vxor.u32 %v2666, 2147483648
        %v2675 = vxor.u32 %v2667, 2147483648
        %v2676 = vxor.u32 %v2668, 2147483648
        %v2677 = vxor.u32 %v2669, 2147483648
        %v2678 = vxor.u32 %v2670, 2147483648
        %v2679 = vxor.u32 %v2671, 2147483648
        %v2680 = vmul.f32 %v2672, 1.442695
        %v2681 = vpow.pop %v2680
        %v2682 = vmul.f32 %v2673, 1.442695
        %v2683 = vpow.pop %v2682
        %v2684 = vmul.f32 %v2674, 1.442695
        %v2685 = vpow.pop %v2684
        %v2686 = vmul.f32 %v2675, 1.442695
        %v2687 = vpow.pop %v2686
        %v2688 = vmul.f32 %v2676, 1.442695
        %v2689 = vpow.pop %v2688
        %v2690 = vmul.f32 %v2677, 1.442695
        %v2691 = vpow.pop %v2690
        %v2692 = vmul.f32 %v2678, 1.442695
        %v2693 = vpow.pop %v2692
        %v2694 = vmul.f32 %v2679, 1.442695
        %v2695 = vpow.pop %v2694
        %v2696 = vadd.f32 %v2681, 1.0
        %v2697 = vadd.f32 %v2683, 1.0
        %v2698 = vadd.f32 %v2685, 1.0
        %v2699 = vadd.f32 %v2687, 1.0
        %v2700 = vadd.f32 %v2689, 1.0
        %v2701 = vadd.f32 %v2691, 1.0
        %v2702 = vadd.f32 %v2693, 1.0
        %v2703 = vadd.f32 %v2695, 1.0
        %v2704 = vrcp.pop %v2696
        %v2705 = vmul.f32 %v2696, %v2704
        %v2706 = vsub.f32 1.0, %v2705
        %v2707 = vmul.f32 %v2704, %v2706
        %v2708 = vadd.f32 %v2704, %v2707
        %vm2709 = vweird.f32 %v2696
        %vm2710 = vweird.f32 %v2704
        %vm2711 = vmor %vm2709, %vm2710
        %v2712 = vsel %vm2711, %v2704, %v2708
        %v2713 = vand.u32 2147483647, %v2696
        %vm2714 = vcmp.eq.f32.partialorder %v2713, 8.507059e+37
        %v2715 = vand.u32 %v2696, 2147483648
        %v2716 = vor.u32 1.1754944e-38, %v2715
        %v2717 = vsel %vm2714, %v2716, %v2712
        %v2718 = vmul.f32 1.0, %v2717
        %v2719 = vrcp.pop %v2697
        %v2720 = vmul.f32 %v2697, %v2719
        %v2721 = vsub.f32 1.0, %v2720
        %v2722 = vmul.f32 %v2719, %v2721
        %v2723 = vadd.f32 %v2719, %v2722
        %vm2724 = vweird.f32 %v2697
        %vm2725 = vweird.f32 %v2719
        %vm2726 = vmor %vm2724, %vm2725
        %v2727 = vsel %vm2726, %v2719, %v2723
        %v2728 = vand.u32 2147483647, %v2697
        %vm2729 = vcmp.eq.f32.partialorder %v2728, 8.507059e+37
        %v2730 = vand.u32 %v2697, 2147483648
        %v2731 = vor.u32 1.1754944e-38, %v2730
        %v2732 = vsel %vm2729, %v2731, %v2727
        %v2733 = vmul.f32 1.0, %v2732
        %v2734 = vrcp.pop %v2698
        %v2735 = vmul.f32 %v2698, %v2734
        %v2736 = vsub.f32 1.0, %v2735
        %v2737 = vmul.f32 %v2734, %v2736
        %v2738 = vadd.f32 %v2734, %v2737
        %vm2739 = vweird.f32 %v2698
        %vm2740 = vweird.f32 %v2734
        %vm2741 = vmor %vm2739, %vm2740
        %v2742 = vsel %vm2741, %v2734, %v2738
        %v2743 = vand.u32 2147483647, %v2698
        %vm2744 = vcmp.eq.f32.partialorder %v2743, 8.507059e+37
        %v2745 = vand.u32 %v2698, 2147483648
        %v2746 = vor.u32 1.1754944e-38, %v2745
        %v2747 = vsel %vm2744, %v2746, %v2742
        %v2748 = vmul.f32 1.0, %v2747
        %v2749 = vrcp.pop %v2699
        %v2750 = vmul.f32 %v2699, %v2749
        %v2751 = vsub.f32 1.0, %v2750
        %v2752 = vmul.f32 %v2749, %v2751
        %v2753 = vadd.f32 %v2749, %v2752
        %vm2754 = vweird.f32 %v2699
        %vm2755 = vweird.f32 %v2749
        %vm2756 = vmor %vm2754, %vm2755
        %v2757 = vsel %vm2756, %v2749, %v2753
        %v2758 = vand.u32 2147483647, %v2699
        %vm2759 = vcmp.eq.f32.partialorder %v2758, 8.507059e+37
        %v2760 = vand.u32 %v2699, 2147483648
        %v2761 = vor.u32 1.1754944e-38, %v2760
        %v2762 = vsel %vm2759, %v2761, %v2757
        %v2763 = vmul.f32 1.0, %v2762
        %v2764 = vrcp.pop %v2700
        %v2765 = vmul.f32 %v2700, %v2764
        %v2766 = vsub.f32 1.0, %v2765
        %v2767 = vmul.f32 %v2764, %v2766
        %v2768 = vadd.f32 %v2764, %v2767
        %vm2769 = vweird.f32 %v2700
        %vm2770 = vweird.f32 %v2764
        %vm2771 = vmor %vm2769, %vm2770
        %v2772 = vsel %vm2771, %v2764, %v2768
        %v2773 = vand.u32 2147483647, %v2700
        %vm2774 = vcmp.eq.f32.partialorder %v2773, 8.507059e+37
        %v2775 = vand.u32 %v2700, 2147483648
        %v2776 = vor.u32 1.1754944e-38, %v2775
        %v2777 = vsel %vm2774, %v2776, %v2772
        %v2778 = vmul.f32 1.0, %v2777
        %v2779 = vrcp.pop %v2701
        %v2780 = vmul.f32 %v2701, %v2779
        %v2781 = vsub.f32 1.0, %v2780
        %v2782 = vmul.f32 %v2779, %v2781
        %v2783 = vadd.f32 %v2779, %v2782
        %vm2784 = vweird.f32 %v2701
        %vm2785 = vweird.f32 %v2779
        %vm2786 = vmor %vm2784, %vm2785
        %v2787 = vsel %vm2786, %v2779, %v2783
        %v2788 = vand.u32 2147483647, %v2701
        %vm2789 = vcmp.eq.f32.partialorder %v2788, 8.507059e+37
        %v2790 = vand.u32 %v2701, 2147483648
        %v2791 = vor.u32 1.1754944e-38, %v2790
        %v2792 = vsel %vm2789, %v2791, %v2787
        %v2793 = vmul.f32 1.0, %v2792
        %v2794 = vrcp.pop %v2702
        %v2795 = vmul.f32 %v2702, %v2794
        %v2796 = vsub.f32 1.0, %v2795
        %v2797 = vmul.f32 %v2794, %v2796
        %v2798 = vadd.f32 %v2794, %v2797
        %vm2799 = vweird.f32 %v2702
        %vm2800 = vweird.f32 %v2794
        %vm2801 = vmor %vm2799, %vm2800
        %v2802 = vsel %vm2801, %v2794, %v2798
        %v2803 = vand.u32 2147483647, %v2702
        %vm2804 = vcmp.eq.f32.partialorder %v2803, 8.507059e+37
        %v2805 = vand.u32 %v2702, 2147483648
        %v2806 = vor.u32 1.1754944e-38, %v2805
        %v2807 = vsel %vm2804, %v2806, %v2802
        %v2808 = vmul.f32 1.0, %v2807
        %v2809 = vrcp.pop %v2703
        %v2810 = vmul.f32 %v2703, %v2809
        %v2811 = vsub.f32 1.0, %v2810
        %v2812 = vmul.f32 %v2809, %v2811
        %v2813 = vadd.f32 %v2809, %v2812
        %vm2814 = vweird.f32 %v2703
        %vm2815 = vweird.f32 %v2809
        %vm2816 = vmor %vm2814, %vm2815
        %v2817 = vsel %vm2816, %v2809, %v2813
        %v2818 = vand.u32 2147483647, %v2703
        %vm2819 = vcmp.eq.f32.partialorder %v2818, 8.507059e+37
        %v2820 = vand.u32 %v2703, 2147483648
        %v2821 = vor.u32 1.1754944e-38, %v2820
        %v2822 = vsel %vm2819, %v2821, %v2817
        %v2823 = vmul.f32 1.0, %v2822
        %2824 = vst [vmem:[%s406] sm:$0xff] %v2718
        %2825 = vst [vmem:[%s406 + $0x8] sm:$0xff] %v2733
        %2826 = vst [vmem:[%s406 + $0x10] sm:$0xff] %v2748
        %2827 = vst [vmem:[%s406 + $0x18] sm:$0xff] %v2763
        %2828 = vst [vmem:[%s406 + $0x20] sm:$0xff] %v2778
        %2829 = vst [vmem:[%s406 + $0x28] sm:$0xff] %v2793
        %2830 = vst [vmem:[%s406 + $0x30] sm:$0xff] %v2808
        %2831 = vst [vmem:[%s406 + $0x38] sm:$0xff] %v2823
        %s2832 = smul.u32 8, %s26
        %p2833 = scmp.lt.s32.totalorder %s2832, 15
        %s2834 = scalar_select %p2833, %s2832, 15
        %s2835 = smul.addr %s2834, 8
        %s2836 = scalar_lea.vmem %s9, %s2835
        // Predicated region
        $region73: #{mi_net_forward.1} parent=55 // pred_check
          %p2837 = pneg %p238
        $region74: #{mi_net_forward.1} parent=55 // pred_check_branch
          %2839 = sbr.rel (%p2837) target = $region76
        $region75: #{mi_net_forward.1} parent=55 // pred_region
          %s2840 = smul.u32 8, %s26
        $region76: #{mi_net_forward.1} parent=55 // pred_fallthru
          _
      $region56: #{mi_net_forward.1} parent=5 // pred_fallthru
        _
      %p2841 = scmp.le.s32.totalorder 2, %s21
      // Predicated region
      $region77: #{mi_net_forward.1} parent=5 // pred_check
        %p2842 = pneg %p2841
      $region78: #{mi_net_forward.1} parent=5 // pred_check_branch
        %2844 = sbr.rel (%p2842) target = $region80
      $region79: #{mi_net_forward.1} parent=5 // pred_region
        %s2845 = ssub.s32 %s21, 2
        // Predicated region
        $region81: #{mi_net_forward.1} parent=79 // pred_check
          %p2846 = pneg %p244
        $region82: #{mi_net_forward.1} parent=79 // pred_check_branch
          %2848 = sbr.rel (%p2846) target = $region84
        $region83: #{mi_net_forward.1} parent=79 // pred_region
          %s2849 = smul.u32 8, %s27
          %p2850 = scmp.lt.s32.totalorder %s2849, 15
          %s2851 = scalar_select %p2850, %s2849, 15
          %s2852 = smul.addr %s2851, 8
          %s2853 = scalar_lea.vmem %s9, %s2852
        $region84: #{mi_net_forward.1} parent=79 // pred_fallthru
          _
      $region80: #{mi_net_forward.1} parent=5 // pred_fallthru
        _
    $region6: #{mi_net_forward.1} parent=1 // loop_footer
      %s25 = sadd.s32 1, %s21
    $region7: #{mi_net_forward.1} parent=1 // loop_footer_branch
      %20 = sbr.rel target = $region3
    $region8: #{mi_net_forward.1} parent=1 // loop_exit
      _
    %2854 = vsyncpa [#allocation4], 1
    %s2855 = scalar_lea.sflag [#allocation4], 1
    %2856 = vsyncpa %s2855, 1
    %2857 = vsyncpa [#allocation6], 1
    %2858 = vsyncpa [#allocation9], 1

</llo_original>
